<compile_context>
chip_gen: v5e
topology: v5e:2x2
jax: 0.10.0
libtpu: 0.0.40
codegen_flags: <defaults>
</compile_context>

<pallas_src>
import functools

import jax
import jax.numpy as jnp
from jax.experimental import pallas as pl
from jax.experimental.pallas import tpu as pltpu


# ---------------------------------------------------------------------------
# Shared per-layer math (post-norm TransformerEncoderLayer, ReLU, eval mode).
# x: [Bt, S, H]; returns z2: [Bt*S, H] f32.
# vecs rows: 0=bo, 1=b2, 2=g1, 3=be1, 4=g2, 5=be2 (rows 6,7 unused padding).
# ---------------------------------------------------------------------------
def _layer_math(x, kbias, wqkv, bqkv, wo, w1, b1, w2, vecs, num_heads):
    Bt, S, H = x.shape
    d_head = H // num_heads
    scale = 1.0 / (d_head ** 0.5)
    mm_dtype = wqkv.dtype  # bfloat16 weights

    x = x.astype(jnp.float32)
    kbias = kbias.astype(jnp.float32)          # [Bt, 1, S] additive key-padding bias
    x2 = x.reshape(Bt * S, H)                  # flatten batch*seq for lane-dense matmuls

    # Fused QKV projection: one MXU matmul with N = 3H (bf16 operands, f32 accumulate).
    qkv = jnp.dot(x2.astype(mm_dtype), wqkv,
                  preferred_element_type=jnp.float32) + bqkv    # [Bt*S, 3H] f32
    q = qkv[:, :H] * scale                     # fold 1/sqrt(d_head) into q
    k = qkv[:, H:2 * H]
    v = qkv[:, 2 * H:]
    q3 = q.reshape(Bt, S, H).astype(mm_dtype)
    k3 = k.reshape(Bt, S, H).astype(mm_dtype)
    v3 = v.reshape(Bt, S, H).astype(mm_dtype)

    # Per-head attention, accumulated directly through the matching Wo row-block.
    attn = jnp.zeros((Bt * S, H), jnp.float32)
    for h in range(num_heads):
        lo = h * d_head
        qh = q3[:, :, lo:lo + d_head]          # [Bt, S, dH]
        kh = k3[:, :, lo:lo + d_head]
        vh = v3[:, :, lo:lo + d_head]
        s = jnp.einsum('bqd,bkd->bqk', qh, kh,
                       preferred_element_type=jnp.float32)      # [Bt, S, S]
        s = s + kbias                          # key-padding bias, broadcast over queries
        s = s - jnp.max(s, axis=-1, keepdims=True)
        p = jnp.exp(s)
        denom = jnp.sum(p, axis=-1, keepdims=True)              # [Bt, S, 1]
        oh = jnp.einsum('bqk,bkd->bqd', p.astype(mm_dtype), vh,
                        preferred_element_type=jnp.float32)     # [Bt, S, dH]
        # Deferred softmax normalization: reciprocal on the EUP (free slot).
        oh = oh * pl.reciprocal(denom, approx=True)
        attn = attn + jnp.dot(oh.reshape(Bt * S, d_head).astype(mm_dtype),
                              wo[lo:lo + d_head, :],
                              preferred_element_type=jnp.float32)

    bo, b2 = vecs[0:1, :], vecs[1:2, :]
    g1, be1 = vecs[2:3, :], vecs[3:4, :]
    g2, be2 = vecs[4:5, :], vecs[5:6, :]
    attn = attn + bo

    # Residual + LayerNorm 1 (post-norm, eps=1e-5) — f32 math.
    y = x2 + attn
    mu = jnp.mean(y, axis=-1, keepdims=True)
    var = jnp.mean(jnp.square(y - mu), axis=-1, keepdims=True)
    y = (y - mu) * jax.lax.rsqrt(var + 1e-5) * g1 + be1

    # Feed-forward (Linear -> ReLU -> Linear), bf16 matmul operands, f32 accumulate.
    f = jnp.dot(y.astype(mm_dtype), w1, preferred_element_type=jnp.float32) + b1
    f = jnp.maximum(f, 0.0)
    f = jnp.dot(f.astype(mm_dtype), w2, preferred_element_type=jnp.float32) + b2

    # Residual + LayerNorm 2.
    z = y + f
    mu2 = jnp.mean(z, axis=-1, keepdims=True)
    var2 = jnp.mean(jnp.square(z - mu2), axis=-1, keepdims=True)
    z = (z - mu2) * jax.lax.rsqrt(var2 + 1e-5) * g2 + be2
    return z                                   # [Bt*S, H] f32


# ---------------------------------------------------------------------------
# Fused whole-model kernel: grid iterates over layers; the activation lives in a
# VMEM scratch that is carried across grid steps (P3 accumulator/init pattern).
# ---------------------------------------------------------------------------
def fused_model_kernel(x_ref, kbias_ref, wqkv_ref, bqkv_ref, wo_ref,
                       w1_ref, b1_ref, w2_ref, vecs_ref, clfw_ref, clfb_ref,
                       out_ref, act_ref, *, num_heads):
    layer = pl.program_id(0)
    Bt, S, H = x_ref.shape

    # First layer: seed the resident activation from the embedded input.
    @pl.when(layer == 0)
    def _():
        act_ref[...] = x_ref[...].astype(jnp.float32)

    z2 = _layer_math(act_ref[...], kbias_ref[...], wqkv_ref[...], bqkv_ref[...],
                     wo_ref[...], w1_ref[...], b1_ref[...], w2_ref[...],
                     vecs_ref[...], num_heads)
    act_ref[...] = z2.reshape(Bt, S, H)

    # Last layer: fused classification head on the CLS token; only logits leave VMEM.
    @pl.when(layer == pl.num_programs(0) - 1)
    def _():
        cls = z2.reshape(Bt, S, H)[:, 0, :]                     # [Bt, H]
        logits = jnp.dot(cls.astype(clfw_ref.dtype), clfw_ref[...],
                         preferred_element_type=jnp.float32) + clfb_ref[...]
        out_ref[...] = logits.astype(out_ref.dtype)


# ---------------------------------------------------------------------------
# Wrappers / specs
# ---------------------------------------------------------------------------
PARAM_KEYS = ("wqkv", "bqkv", "wo", "w1", "b1", "w2", "vecs")


def _nbytes(a):
    return a.size * jnp.dtype(a.dtype).itemsize


def stack_layer_params(layer_params):
    """Stack per-layer dicts into one dict of [L, ...] arrays (layer axis leading)."""
    return {k: jnp.stack([p[k] for p in layer_params], axis=0) for k in PARAM_KEYS}


def _vmem_limit_bytes(x, kbias, stacked, clf_w, clf_b, num_layers):
    per_layer = sum(_nbytes(stacked[k]) for k in PARAM_KEYS) // max(num_layers, 1)
    fixed = _nbytes(x) + _nbytes(kbias) + _nbytes(clf_w) + _nbytes(clf_b)
    # 2x per-layer for double-buffered weight blocks, generous 4x margin for
    # in-kernel temporaries; clamp to a value safe on every generation (v7x = 64 MiB).
    est = 4 * (2 * per_layer + fixed)
    return int(min(48 * 1024 * 1024, max(16 * 1024 * 1024, est)))


def fine_tune_student_pallas(x, kbias, stacked, clf_w, clf_b, num_heads):
    """x: [B, S, H] embeddings, kbias: [B, 1, S], stacked: dict of [L, ...] weights."""
    B, S, H = x.shape
    L = stacked["wqkv"].shape[0]
    num_labels = clf_w.shape[1]
    three_h = stacked["wqkv"].shape[2]
    ff = stacked["w1"].shape[2]

    in_specs = [
        pl.BlockSpec((B, S, H), lambda l: (0, 0, 0)),              # x (used at step 0)
        pl.BlockSpec((B, 1, S), lambda l: (0, 0, 0)),              # key-padding bias
        pl.BlockSpec((None, H, three_h), lambda l: (l, 0, 0)),     # wqkv  [L,H,3H]
        pl.BlockSpec((None, 1, three_h), lambda l: (l, 0, 0)),     # bqkv  [L,1,3H]
        pl.BlockSpec((None, H, H), lambda l: (l, 0, 0)),           # wo    [L,H,H]
        pl.BlockSpec((None, H, ff), lambda l: (l, 0, 0)),          # w1    [L,H,FF]
        pl.BlockSpec((None, 1, ff), lambda l: (l, 0, 0)),          # b1    [L,1,FF]
        pl.BlockSpec((None, ff, H), lambda l: (l, 0, 0)),          # w2    [L,FF,H]
        pl.BlockSpec((None, 8, H), lambda l: (l, 0, 0)),           # packed vecs [L,8,H]
        pl.BlockSpec((H, num_labels), lambda l: (0, 0)),           # clf_w
        pl.BlockSpec((1, num_labels), lambda l: (0, 0)),           # clf_b
    ]

    kernel = functools.partial(fused_model_kernel, num_heads=num_heads)
    return pl.pallas_call(
        kernel,
        out_shape=jax.ShapeDtypeStruct((B, num_labels), jnp.float32),
        grid_spec=pltpu.PrefetchScalarGridSpec(
            num_scalar_prefetch=0,
            grid=(L,),
            in_specs=in_specs,
            out_specs=pl.BlockSpec((B, num_labels), lambda l: (0, 0)),
            scratch_shapes=[pltpu.VMEM((B, S, H), jnp.float32)],   # resident activation
        ),
        compiler_params=pltpu.CompilerParams(
            dimension_semantics=("arbitrary",),   # layer axis is a carried dependency
            vmem_limit_bytes=_vmem_limit_bytes(x, kbias, stacked, clf_w, clf_b, L),
        ),
    )(x, kbias, stacked["wqkv"], stacked["bqkv"], stacked["wo"],
      stacked["w1"], stacked["b1"], stacked["w2"], stacked["vecs"],
      clf_w, clf_b)


# ---------------------------------------------------------------------------
# Full forward pass (mirrors FineTuneStudentModel.forward)
# ---------------------------------------------------------------------------
def fine_tune_student_forward(input_ids, attention_mask, emb_table,
                              layer_params, clf_w, clf_b, num_heads):
    B, S = input_ids.shape
    # Embedding lookup (glue: plain JAX gather).
    x = jnp.take(emb_table, input_ids, axis=0)                  # [B, S, H] f32

    # src_key_padding_mask = ~attention_mask.bool(): padded keys get a large negative bias.
    if attention_mask is None:
        kbias = jnp.zeros((B, 1, S), dtype=jnp.float32)
    else:
        kbias = jnp.where(attention_mask.astype(bool), 0.0, -1e9).astype(jnp.float32)
        kbias = kbias.reshape(B, 1, S)

    # The PyTorch module transposes to [S, B, H] and back around each layer;
    # that is purely a layout round-trip, so we keep [B, S, H] throughout.
    stacked = stack_layer_params(layer_params)
    return fine_tune_student_pallas(x, kbias, stacked, clf_w, clf_b, num_heads)


# ---------------------------------------------------------------------------
# Deterministic parameter construction + demo run
# ---------------------------------------------------------------------------
def make_layer_params(key, hidden, ff):
    ks = jax.random.split(key, 6)
    scale = 0.02
    wq = scale * jax.random.normal(ks[0], (hidden, hidden), jnp.float32)
    wk = scale * jax.random.normal(ks[1], (hidden, hidden), jnp.float32)
    wv = scale * jax.random.normal(ks[2], (hidden, hidden), jnp.float32)
    # Packed bias / layernorm vectors: rows = [bo, b2, g1, be1, g2, be2, pad, pad]
    vecs = jnp.zeros((8, hidden), jnp.float32).at[2].set(1.0).at[4].set(1.0)
    return {
        "wqkv": jnp.concatenate([wq, wk, wv], axis=1).astype(jnp.bfloat16),   # [H, 3H]
        "bqkv": jnp.zeros((1, 3 * hidden), jnp.float32),
        "wo": (scale * jax.random.normal(ks[3], (hidden, hidden), jnp.float32)
               ).astype(jnp.bfloat16),
        "w1": (scale * jax.random.normal(ks[4], (hidden, ff), jnp.float32)
               ).astype(jnp.bfloat16),
        "b1": jnp.zeros((1, ff), jnp.float32),
        "w2": (scale * jax.random.normal(ks[5], (ff, hidden), jnp.float32)
               ).astype(jnp.bfloat16),
        "vecs": vecs,
    }


if __name__ == "__main__":
    B, S, H = 2, 8, 32          # batch, seq, hidden
    NUM_HEADS = 4
    FF = 64                      # feed-forward dim of the student encoder layers
    VOCAB = 100
    NUM_LAYERS = 2
    NUM_LABELS = 2

    key = jax.random.PRNGKey(0)
    k_emb, k_layers, k_clf, k_ids = jax.random.split(key, 4)

    emb_table = 0.02 * jax.random.normal(k_emb, (VOCAB, H), jnp.float32)
    layer_keys = jax.random.split(k_layers, NUM_LAYERS)
    layer_params = [make_layer_params(lk, H, FF) for lk in layer_keys]
    clf_w = (0.02 * jax.random.normal(k_clf, (H, NUM_LABELS), jnp.float32)
             ).astype(jnp.bfloat16)
    clf_b = jnp.zeros((1, NUM_LABELS), jnp.float32)

    input_ids = jax.random.randint(k_ids, (B, S), 0, VOCAB)
    attention_mask = jnp.ones((B, S), dtype=jnp.int32)   # all tokens valid

    logits = fine_tune_student_forward(
        input_ids, attention_mask, emb_table, layer_params, clf_w, clf_b, NUM_HEADS)
    jax.block_until_ready(logits)
    assert logits.shape == (B, NUM_LABELS)
    print("KERNEL_OK")
</pallas_src>

<mosaic_0001>
module attributes {stable_mosaic.version = 11 : i64} {
  func.func @fused_model_kernel(%arg0: i32, %arg1: memref<2x8x32xf32, #tpu.memory_space<vmem>>, %arg2: memref<2x1x8xf32, #tpu.memory_space<vmem>>, %arg3: memref<1x32x96xbf16, #tpu.memory_space<vmem>>, %arg4: memref<1x1x96xf32, #tpu.memory_space<vmem>>, %arg5: memref<1x32x32xbf16, #tpu.memory_space<vmem>>, %arg6: memref<1x32x64xbf16, #tpu.memory_space<vmem>>, %arg7: memref<1x1x64xf32, #tpu.memory_space<vmem>>, %arg8: memref<1x64x32xbf16, #tpu.memory_space<vmem>>, %arg9: memref<1x8x32xf32, #tpu.memory_space<vmem>>, %arg10: memref<32x2xbf16, #tpu.memory_space<vmem>>, %arg11: memref<1x2xf32, #tpu.memory_space<vmem>>, %arg12: memref<2x2xf32, #tpu.memory_space<vmem>>, %arg13: memref<2x8x32xf32, #tpu.memory_space<vmem>>) attributes {dimension_semantics = [#tpu.dimension_semantics<arbitrary>], iteration_bounds = array<i64: 2>, scalar_prefetch = 0 : i64, scratch_operands = 1 : i64, tpu.core_type = #tpu.core_type<tc>, window_params = [{pipeline_mode = #tpu.pipeline_mode<synchronous>, transform_indices = @transform_0, window_bounds = array<i64: 2, 8, 32>}, {pipeline_mode = #tpu.pipeline_mode<synchronous>, transform_indices = @transform_1, window_bounds = array<i64: 2, 1, 8>}, {transform_indices = @transform_2, window_bounds = array<i64: 1, 32, 96>}, {transform_indices = @transform_3, window_bounds = array<i64: 1, 1, 96>}, {transform_indices = @transform_4, window_bounds = array<i64: 1, 32, 32>}, {transform_indices = @transform_5, window_bounds = array<i64: 1, 32, 64>}, {transform_indices = @transform_6, window_bounds = array<i64: 1, 1, 64>}, {transform_indices = @transform_7, window_bounds = array<i64: 1, 64, 32>}, {transform_indices = @transform_8, window_bounds = array<i64: 1, 8, 32>}, {pipeline_mode = #tpu.pipeline_mode<synchronous>, transform_indices = @transform_9, window_bounds = array<i64: 32, 2>}, {pipeline_mode = #tpu.pipeline_mode<synchronous>, transform_indices = @transform_10, window_bounds = array<i64: 1, 2>}, {pipeline_mode = #tpu.pipeline_mode<synchronous>, transform_indices = @transform_11, window_bounds = array<i64: 2, 2>}]} {
    %c0_i32 = arith.constant 0 : i32
    %0 = arith.cmpi eq, %arg0, %c0_i32 : i32
    %1 = arith.extui %0 : i1 to i32
    %c0_i32_0 = arith.constant 0 : i32
    %2 = arith.cmpi ne, %1, %c0_i32_0 : i32
    scf.if %2 {
      %c0_66 = arith.constant 0 : index
      %c0_67 = arith.constant 0 : index
      %c0_68 = arith.constant 0 : index
      %197 = vector.load %arg1[%c0_66, %c0_67, %c0_68] : memref<2x8x32xf32, #tpu.memory_space<vmem>>, vector<2x8x32xf32>
      %c0_69 = arith.constant 0 : index
      %c0_70 = arith.constant 0 : index
      %c0_71 = arith.constant 0 : index
      %198 = vector.load %arg13[%c0_69, %c0_70, %c0_71] : memref<2x8x32xf32, #tpu.memory_space<vmem>>, vector<2x8x32xf32>
      tpu.vector_store %arg13[%c0_69, %c0_70, %c0_71], %197 {strides = array<i32>} : memref<2x8x32xf32, #tpu.memory_space<vmem>>, vector<2x8x32xf32>,
    } else {
    }
    %c0 = arith.constant 0 : index
    %c0_1 = arith.constant 0 : index
    %c0_2 = arith.constant 0 : index
    %3 = vector.load %arg13[%c0, %c0_1, %c0_2] : memref<2x8x32xf32, #tpu.memory_space<vmem>>, vector<2x8x32xf32>
    %c0_3 = arith.constant 0 : index
    %c0_4 = arith.constant 0 : index
    %c0_5 = arith.constant 0 : index
    %4 = vector.load %arg2[%c0_3, %c0_4, %c0_5] : memref<2x1x8xf32, #tpu.memory_space<vmem>>, vector<2x1x8xf32>
    %c0_6 = arith.constant 0 : index
    %c0_7 = arith.constant 0 : index
    %c0_8 = arith.constant 0 : index
    %5 = vector.load %arg3[%c0_6, %c0_7, %c0_8] : memref<1x32x96xbf16, #tpu.memory_space<vmem>>, vector<1x32x96xbf16>
    %6 = vector.shape_cast %5 : vector<1x32x96xbf16> to vector<32x96xbf16>
    %c0_9 = arith.constant 0 : index
    %c0_10 = arith.constant 0 : index
    %c0_11 = arith.constant 0 : index
    %7 = vector.load %arg4[%c0_9, %c0_10, %c0_11] : memref<1x1x96xf32, #tpu.memory_space<vmem>>, vector<1x1x96xf32>
    %8 = vector.shape_cast %7 : vector<1x1x96xf32> to vector<1x96xf32>
    %c0_12 = arith.constant 0 : index
    %c0_13 = arith.constant 0 : index
    %c0_14 = arith.constant 0 : index
    %9 = vector.load %arg5[%c0_12, %c0_13, %c0_14] : memref<1x32x32xbf16, #tpu.memory_space<vmem>>, vector<1x32x32xbf16>
    %10 = vector.shape_cast %9 : vector<1x32x32xbf16> to vector<32x32xbf16>
    %c0_15 = arith.constant 0 : index
    %c0_16 = arith.constant 0 : index
    %c0_17 = arith.constant 0 : index
    %11 = vector.load %arg6[%c0_15, %c0_16, %c0_17] : memref<1x32x64xbf16, #tpu.memory_space<vmem>>, vector<1x32x64xbf16>
    %12 = vector.shape_cast %11 : vector<1x32x64xbf16> to vector<32x64xbf16>
    %c0_18 = arith.constant 0 : index
    %c0_19 = arith.constant 0 : index
    %c0_20 = arith.constant 0 : index
    %13 = vector.load %arg7[%c0_18, %c0_19, %c0_20] : memref<1x1x64xf32, #tpu.memory_space<vmem>>, vector<1x1x64xf32>
    %14 = vector.shape_cast %13 : vector<1x1x64xf32> to vector<1x64xf32>
    %c0_21 = arith.constant 0 : index
    %c0_22 = arith.constant 0 : index
    %c0_23 = arith.constant 0 : index
    %15 = vector.load %arg8[%c0_21, %c0_22, %c0_23] : memref<1x64x32xbf16, #tpu.memory_space<vmem>>, vector<1x64x32xbf16>
    %16 = vector.shape_cast %15 : vector<1x64x32xbf16> to vector<64x32xbf16>
    %c0_24 = arith.constant 0 : index
    %c0_25 = arith.constant 0 : index
    %c0_26 = arith.constant 0 : index
    %17 = vector.load %arg9[%c0_24, %c0_25, %c0_26] : memref<1x8x32xf32, #tpu.memory_space<vmem>>, vector<1x8x32xf32>
    %18 = vector.shape_cast %17 : vector<1x8x32xf32> to vector<8x32xf32>
    %19 = vector.shape_cast %3 : vector<2x8x32xf32> to vector<16x32xf32>
    %20 = arith.truncf %19 : vector<16x32xf32> to vector<16x32xbf16>
    %cst = arith.constant dense<0.000000e+00> : vector<16x96xf32>
    %21 = tpu.matmul %20, %6, %cst {dimension_numbers = #tpu.dot_dimension_numbers<[1], [0], [0], [1], [0, 0, 1, 1], [], []>} : vector<16x32xbf16>, vector<32x96xbf16>, vector<16x96xf32> -> vector<16x96xf32>
    %22 = vector.broadcast %8 : vector<1x96xf32> to vector<16x96xf32>
    %23 = arith.addf %21, %22 : vector<16x96xf32>
    %24 = vector.extract_strided_slice %23 {offsets = [0, 0], sizes = [16, 32], strides = [1, 1]} : vector<16x96xf32> to vector<16x32xf32>
    %cst_27 = arith.constant 0.353553385 : f32
    %25 = vector.broadcast %cst_27 : f32 to vector<16x32xf32>
    %26 = arith.mulf %24, %25 : vector<16x32xf32>
    %27 = vector.extract_strided_slice %23 {offsets = [0, 32], sizes = [16, 32], strides = [1, 1]} : vector<16x96xf32> to vector<16x32xf32>
    %28 = vector.extract_strided_slice %23 {offsets = [0, 64], sizes = [16, 32], strides = [1, 1]} : vector<16x96xf32> to vector<16x32xf32>
    %29 = vector.shape_cast %26 : vector<16x32xf32> to vector<2x8x32xf32>
    %30 = arith.truncf %29 : vector<2x8x32xf32> to vector<2x8x32xbf16>
    %31 = vector.shape_cast %27 : vector<16x32xf32> to vector<2x8x32xf32>
    %32 = arith.truncf %31 : vector<2x8x32xf32> to vector<2x8x32xbf16>
    %33 = vector.shape_cast %28 : vector<16x32xf32> to vector<2x8x32xf32>
    %34 = arith.truncf %33 : vector<2x8x32xf32> to vector<2x8x32xbf16>
    %cst_28 = arith.constant 0.000000e+00 : f32
    %35 = vector.broadcast %cst_28 : f32 to vector<16x32xf32>
    %36 = vector.extract_strided_slice %30 {offsets = [0, 0, 0], sizes = [2, 8, 8], strides = [1, 1, 1]} : vector<2x8x32xbf16> to vector<2x8x8xbf16>
    %37 = vector.extract_strided_slice %32 {offsets = [0, 0, 0], sizes = [2, 8, 8], strides = [1, 1, 1]} : vector<2x8x32xbf16> to vector<2x8x8xbf16>
    %38 = vector.extract_strided_slice %34 {offsets = [0, 0, 0], sizes = [2, 8, 8], strides = [1, 1, 1]} : vector<2x8x32xbf16> to vector<2x8x8xbf16>
    "tpu.trace_start"() <{level = 10 : i32, message = "bqd,bkd->bqk"}> : () -> ()
    %cst_29 = arith.constant dense<0.000000e+00> : vector<2x8x8xf32>
    %39 = tpu.matmul %36, %37, %cst_29 {dimension_numbers = #tpu.dot_dimension_numbers<[2], [2], [1], [1], [0, 0, 0, 1, 1, 1], [0], [0]>} : vector<2x8x8xbf16>, vector<2x8x8xbf16>, vector<2x8x8xf32> -> vector<2x8x8xf32>
    "tpu.trace_stop"() : () -> ()
    %40 = vector.broadcast %4 : vector<2x1x8xf32> to vector<2x8x8xf32>
    %41 = arith.addf %39, %40 : vector<2x8x8xf32>
    %cst_30 = arith.constant dense<0xFF800000> : vector<2x8xf32>
    %42 = vector.multi_reduction <maximumf>, %41, %cst_30 [2] : vector<2x8x8xf32> to vector<2x8xf32>
    %43 = vector.shape_cast %42 : vector<2x8xf32> to vector<2x8x1xf32>
    %44 = vector.broadcast %43 : vector<2x8x1xf32> to vector<2x8x8xf32>
    %45 = arith.subf %41, %44 : vector<2x8x8xf32>
    %46 = math.exp %45 : vector<2x8x8xf32>
    %cst_31 = arith.constant dense<0.000000e+00> : vector<2x8xf32>
    %47 = vector.multi_reduction <add>, %46, %cst_31 [2] : vector<2x8x8xf32> to vector<2x8xf32>
    %48 = vector.shape_cast %47 : vector<2x8xf32> to vector<2x8x1xf32>
    %49 = arith.truncf %46 : vector<2x8x8xf32> to vector<2x8x8xbf16>
    "tpu.trace_start"() <{level = 10 : i32, message = "bqk,bkd->bqd"}> : () -> ()
    %cst_32 = arith.constant dense<0.000000e+00> : vector<2x8x8xf32>
    %50 = tpu.matmul %49, %38, %cst_32 {dimension_numbers = #tpu.dot_dimension_numbers<[2], [1], [1], [2], [0, 0, 0, 1, 1, 2], [0], [0]>} : vector<2x8x8xbf16>, vector<2x8x8xbf16>, vector<2x8x8xf32> -> vector<2x8x8xf32>
    "tpu.trace_stop"() : () -> ()
    %51 = tpu.reciprocal %48 {approx = true} : vector<2x8x1xf32> -> vector<2x8x1xf32>
    %52 = vector.broadcast %51 : vector<2x8x1xf32> to vector<2x8x8xf32>
    %53 = arith.mulf %50, %52 : vector<2x8x8xf32>
    %54 = vector.shape_cast %53 : vector<2x8x8xf32> to vector<16x8xf32>
    %55 = arith.truncf %54 : vector<16x8xf32> to vector<16x8xbf16>
    %56 = vector.extract_strided_slice %10 {offsets = [0, 0], sizes = [8, 32], strides = [1, 1]} : vector<32x32xbf16> to vector<8x32xbf16>
    %cst_33 = arith.constant dense<0.000000e+00> : vector<16x32xf32>
    %57 = tpu.matmul %55, %56, %cst_33 {dimension_numbers = #tpu.dot_dimension_numbers<[1], [0], [0], [1], [0, 0, 1, 1], [], []>} : vector<16x8xbf16>, vector<8x32xbf16>, vector<16x32xf32> -> vector<16x32xf32>
    %58 = arith.addf %35, %57 : vector<16x32xf32>
    %59 = vector.extract_strided_slice %30 {offsets = [0, 0, 8], sizes = [2, 8, 8], strides = [1, 1, 1]} : vector<2x8x32xbf16> to vector<2x8x8xbf16>
    %60 = vector.extract_strided_slice %32 {offsets = [0, 0, 8], sizes = [2, 8, 8], strides = [1, 1, 1]} : vector<2x8x32xbf16> to vector<2x8x8xbf16>
    %61 = vector.extract_strided_slice %34 {offsets = [0, 0, 8], sizes = [2, 8, 8], strides = [1, 1, 1]} : vector<2x8x32xbf16> to vector<2x8x8xbf16>
    "tpu.trace_start"() <{level = 10 : i32, message = "bqd,bkd->bqk"}> : () -> ()
    %cst_34 = arith.constant dense<0.000000e+00> : vector<2x8x8xf32>
    %62 = tpu.matmul %59, %60, %cst_34 {dimension_numbers = #tpu.dot_dimension_numbers<[2], [2], [1], [1], [0, 0, 0, 1, 1, 1], [0], [0]>} : vector<2x8x8xbf16>, vector<2x8x8xbf16>, vector<2x8x8xf32> -> vector<2x8x8xf32>
    "tpu.trace_stop"() : () -> ()
    %63 = vector.broadcast %4 : vector<2x1x8xf32> to vector<2x8x8xf32>
    %64 = arith.addf %62, %63 : vector<2x8x8xf32>
    %cst_35 = arith.constant dense<0xFF800000> : vector<2x8xf32>
    %65 = vector.multi_reduction <maximumf>, %64, %cst_35 [2] : vector<2x8x8xf32> to vector<2x8xf32>
    %66 = vector.shape_cast %65 : vector<2x8xf32> to vector<2x8x1xf32>
    %67 = vector.broadcast %66 : vector<2x8x1xf32> to vector<2x8x8xf32>
    %68 = arith.subf %64, %67 : vector<2x8x8xf32>
    %69 = math.exp %68 : vector<2x8x8xf32>
    %cst_36 = arith.constant dense<0.000000e+00> : vector<2x8xf32>
    %70 = vector.multi_reduction <add>, %69, %cst_36 [2] : vector<2x8x8xf32> to vector<2x8xf32>
    %71 = vector.shape_cast %70 : vector<2x8xf32> to vector<2x8x1xf32>
    %72 = arith.truncf %69 : vector<2x8x8xf32> to vector<2x8x8xbf16>
    "tpu.trace_start"() <{level = 10 : i32, message = "bqk,bkd->bqd"}> : () -> ()
    %cst_37 = arith.constant dense<0.000000e+00> : vector<2x8x8xf32>
    %73 = tpu.matmul %72, %61, %cst_37 {dimension_numbers = #tpu.dot_dimension_numbers<[2], [1], [1], [2], [0, 0, 0, 1, 1, 2], [0], [0]>} : vector<2x8x8xbf16>, vector<2x8x8xbf16>, vector<2x8x8xf32> -> vector<2x8x8xf32>
    "tpu.trace_stop"() : () -> ()
    %74 = tpu.reciprocal %71 {approx = true} : vector<2x8x1xf32> -> vector<2x8x1xf32>
    %75 = vector.broadcast %74 : vector<2x8x1xf32> to vector<2x8x8xf32>
    %76 = arith.mulf %73, %75 : vector<2x8x8xf32>
    %77 = vector.shape_cast %76 : vector<2x8x8xf32> to vector<16x8xf32>
    %78 = arith.truncf %77 : vector<16x8xf32> to vector<16x8xbf16>
    %79 = vector.extract_strided_slice %10 {offsets = [8, 0], sizes = [8, 32], strides = [1, 1]} : vector<32x32xbf16> to vector<8x32xbf16>
    %cst_38 = arith.constant dense<0.000000e+00> : vector<16x32xf32>
    %80 = tpu.matmul %78, %79, %cst_38 {dimension_numbers = #tpu.dot_dimension_numbers<[1], [0], [0], [1], [0, 0, 1, 1], [], []>} : vector<16x8xbf16>, vector<8x32xbf16>, vector<16x32xf32> -> vector<16x32xf32>
    %81 = arith.addf %58, %80 : vector<16x32xf32>
    %82 = vector.extract_strided_slice %30 {offsets = [0, 0, 16], sizes = [2, 8, 8], strides = [1, 1, 1]} : vector<2x8x32xbf16> to vector<2x8x8xbf16>
    %83 = vector.extract_strided_slice %32 {offsets = [0, 0, 16], sizes = [2, 8, 8], strides = [1, 1, 1]} : vector<2x8x32xbf16> to vector<2x8x8xbf16>
    %84 = vector.extract_strided_slice %34 {offsets = [0, 0, 16], sizes = [2, 8, 8], strides = [1, 1, 1]} : vector<2x8x32xbf16> to vector<2x8x8xbf16>
    "tpu.trace_start"() <{level = 10 : i32, message = "bqd,bkd->bqk"}> : () -> ()
    %cst_39 = arith.constant dense<0.000000e+00> : vector<2x8x8xf32>
    %85 = tpu.matmul %82, %83, %cst_39 {dimension_numbers = #tpu.dot_dimension_numbers<[2], [2], [1], [1], [0, 0, 0, 1, 1, 1], [0], [0]>} : vector<2x8x8xbf16>, vector<2x8x8xbf16>, vector<2x8x8xf32> -> vector<2x8x8xf32>
    "tpu.trace_stop"() : () -> ()
    %86 = vector.broadcast %4 : vector<2x1x8xf32> to vector<2x8x8xf32>
    %87 = arith.addf %85, %86 : vector<2x8x8xf32>
    %cst_40 = arith.constant dense<0xFF800000> : vector<2x8xf32>
    %88 = vector.multi_reduction <maximumf>, %87, %cst_40 [2] : vector<2x8x8xf32> to vector<2x8xf32>
    %89 = vector.shape_cast %88 : vector<2x8xf32> to vector<2x8x1xf32>
    %90 = vector.broadcast %89 : vector<2x8x1xf32> to vector<2x8x8xf32>
    %91 = arith.subf %87, %90 : vector<2x8x8xf32>
    %92 = math.exp %91 : vector<2x8x8xf32>
    %cst_41 = arith.constant dense<0.000000e+00> : vector<2x8xf32>
    %93 = vector.multi_reduction <add>, %92, %cst_41 [2] : vector<2x8x8xf32> to vector<2x8xf32>
    %94 = vector.shape_cast %93 : vector<2x8xf32> to vector<2x8x1xf32>
    %95 = arith.truncf %92 : vector<2x8x8xf32> to vector<2x8x8xbf16>
    "tpu.trace_start"() <{level = 10 : i32, message = "bqk,bkd->bqd"}> : () -> ()
    %cst_42 = arith.constant dense<0.000000e+00> : vector<2x8x8xf32>
    %96 = tpu.matmul %95, %84, %cst_42 {dimension_numbers = #tpu.dot_dimension_numbers<[2], [1], [1], [2], [0, 0, 0, 1, 1, 2], [0], [0]>} : vector<2x8x8xbf16>, vector<2x8x8xbf16>, vector<2x8x8xf32> -> vector<2x8x8xf32>
    "tpu.trace_stop"() : () -> ()
    %97 = tpu.reciprocal %94 {approx = true} : vector<2x8x1xf32> -> vector<2x8x1xf32>
    %98 = vector.broadcast %97 : vector<2x8x1xf32> to vector<2x8x8xf32>
    %99 = arith.mulf %96, %98 : vector<2x8x8xf32>
    %100 = vector.shape_cast %99 : vector<2x8x8xf32> to vector<16x8xf32>
    %101 = arith.truncf %100 : vector<16x8xf32> to vector<16x8xbf16>
    %102 = vector.extract_strided_slice %10 {offsets = [16, 0], sizes = [8, 32], strides = [1, 1]} : vector<32x32xbf16> to vector<8x32xbf16>
    %cst_43 = arith.constant dense<0.000000e+00> : vector<16x32xf32>
    %103 = tpu.matmul %101, %102, %cst_43 {dimension_numbers = #tpu.dot_dimension_numbers<[1], [0], [0], [1], [0, 0, 1, 1], [], []>} : vector<16x8xbf16>, vector<8x32xbf16>, vector<16x32xf32> -> vector<16x32xf32>
    %104 = arith.addf %81, %103 : vector<16x32xf32>
    %105 = vector.extract_strided_slice %30 {offsets = [0, 0, 24], sizes = [2, 8, 8], strides = [1, 1, 1]} : vector<2x8x32xbf16> to vector<2x8x8xbf16>
    %106 = vector.extract_strided_slice %32 {offsets = [0, 0, 24], sizes = [2, 8, 8], strides = [1, 1, 1]} : vector<2x8x32xbf16> to vector<2x8x8xbf16>
    %107 = vector.extract_strided_slice %34 {offsets = [0, 0, 24], sizes = [2, 8, 8], strides = [1, 1, 1]} : vector<2x8x32xbf16> to vector<2x8x8xbf16>
    "tpu.trace_start"() <{level = 10 : i32, message = "bqd,bkd->bqk"}> : () -> ()
    %cst_44 = arith.constant dense<0.000000e+00> : vector<2x8x8xf32>
    %108 = tpu.matmul %105, %106, %cst_44 {dimension_numbers = #tpu.dot_dimension_numbers<[2], [2], [1], [1], [0, 0, 0, 1, 1, 1], [0], [0]>} : vector<2x8x8xbf16>, vector<2x8x8xbf16>, vector<2x8x8xf32> -> vector<2x8x8xf32>
    "tpu.trace_stop"() : () -> ()
    %109 = vector.broadcast %4 : vector<2x1x8xf32> to vector<2x8x8xf32>
    %110 = arith.addf %108, %109 : vector<2x8x8xf32>
    %cst_45 = arith.constant dense<0xFF800000> : vector<2x8xf32>
    %111 = vector.multi_reduction <maximumf>, %110, %cst_45 [2] : vector<2x8x8xf32> to vector<2x8xf32>
    %112 = vector.shape_cast %111 : vector<2x8xf32> to vector<2x8x1xf32>
    %113 = vector.broadcast %112 : vector<2x8x1xf32> to vector<2x8x8xf32>
    %114 = arith.subf %110, %113 : vector<2x8x8xf32>
    %115 = math.exp %114 : vector<2x8x8xf32>
    %cst_46 = arith.constant dense<0.000000e+00> : vector<2x8xf32>
    %116 = vector.multi_reduction <add>, %115, %cst_46 [2] : vector<2x8x8xf32> to vector<2x8xf32>
    %117 = vector.shape_cast %116 : vector<2x8xf32> to vector<2x8x1xf32>
    %118 = arith.truncf %115 : vector<2x8x8xf32> to vector<2x8x8xbf16>
    "tpu.trace_start"() <{level = 10 : i32, message = "bqk,bkd->bqd"}> : () -> ()
    %cst_47 = arith.constant dense<0.000000e+00> : vector<2x8x8xf32>
    %119 = tpu.matmul %118, %107, %cst_47 {dimension_numbers = #tpu.dot_dimension_numbers<[2], [1], [1], [2], [0, 0, 0, 1, 1, 2], [0], [0]>} : vector<2x8x8xbf16>, vector<2x8x8xbf16>, vector<2x8x8xf32> -> vector<2x8x8xf32>
    "tpu.trace_stop"() : () -> ()
    %120 = tpu.reciprocal %117 {approx = true} : vector<2x8x1xf32> -> vector<2x8x1xf32>
    %121 = vector.broadcast %120 : vector<2x8x1xf32> to vector<2x8x8xf32>
    %122 = arith.mulf %119, %121 : vector<2x8x8xf32>
    %123 = vector.shape_cast %122 : vector<2x8x8xf32> to vector<16x8xf32>
    %124 = arith.truncf %123 : vector<16x8xf32> to vector<16x8xbf16>
    %125 = vector.extract_strided_slice %10 {offsets = [24, 0], sizes = [8, 32], strides = [1, 1]} : vector<32x32xbf16> to vector<8x32xbf16>
    %cst_48 = arith.constant dense<0.000000e+00> : vector<16x32xf32>
    %126 = tpu.matmul %124, %125, %cst_48 {dimension_numbers = #tpu.dot_dimension_numbers<[1], [0], [0], [1], [0, 0, 1, 1], [], []>} : vector<16x8xbf16>, vector<8x32xbf16>, vector<16x32xf32> -> vector<16x32xf32>
    %127 = arith.addf %104, %126 : vector<16x32xf32>
    %128 = vector.extract_strided_slice %18 {offsets = [0, 0], sizes = [1, 32], strides = [1, 1]} : vector<8x32xf32> to vector<1x32xf32>
    %129 = vector.extract_strided_slice %18 {offsets = [1, 0], sizes = [1, 32], strides = [1, 1]} : vector<8x32xf32> to vector<1x32xf32>
    %130 = vector.extract_strided_slice %18 {offsets = [2, 0], sizes = [1, 32], strides = [1, 1]} : vector<8x32xf32> to vector<1x32xf32>
    %131 = vector.extract_strided_slice %18 {offsets = [3, 0], sizes = [1, 32], strides = [1, 1]} : vector<8x32xf32> to vector<1x32xf32>
    %132 = vector.extract_strided_slice %18 {offsets = [4, 0], sizes = [1, 32], strides = [1, 1]} : vector<8x32xf32> to vector<1x32xf32>
    %133 = vector.extract_strided_slice %18 {offsets = [5, 0], sizes = [1, 32], strides = [1, 1]} : vector<8x32xf32> to vector<1x32xf32>
    %134 = vector.broadcast %128 : vector<1x32xf32> to vector<16x32xf32>
    %135 = arith.addf %127, %134 : vector<16x32xf32>
    %136 = arith.addf %19, %135 : vector<16x32xf32>
    %cst_49 = arith.constant dense<0.000000e+00> : vector<16xf32>
    %137 = vector.multi_reduction <add>, %136, %cst_49 [1] : vector<16x32xf32> to vector<16xf32>
    %138 = vector.shape_cast %137 : vector<16xf32> to vector<16x1xf32>
    %cst_50 = arith.constant 3.200000e+01 : f32
    %139 = vector.broadcast %cst_50 : f32 to vector<16x1xf32>
    %140 = arith.divf %138, %139 : vector<16x1xf32>
    %141 = vector.broadcast %140 : vector<16x1xf32> to vector<16x32xf32>
    %142 = arith.subf %136, %141 : vector<16x32xf32>
    %143 = arith.mulf %142, %142 : vector<16x32xf32>
    %cst_51 = arith.constant dense<0.000000e+00> : vector<16xf32>
    %144 = vector.multi_reduction <add>, %143, %cst_51 [1] : vector<16x32xf32> to vector<16xf32>
    %145 = vector.shape_cast %144 : vector<16xf32> to vector<16x1xf32>
    %cst_52 = arith.constant 3.200000e+01 : f32
    %146 = vector.broadcast %cst_52 : f32 to vector<16x1xf32>
    %147 = arith.divf %145, %146 : vector<16x1xf32>
    %148 = vector.broadcast %140 : vector<16x1xf32> to vector<16x32xf32>
    %149 = arith.subf %136, %148 : vector<16x32xf32>
    %cst_53 = arith.constant 9.99999974E-6 : f32
    %150 = vector.broadcast %cst_53 : f32 to vector<16x1xf32>
    %151 = arith.addf %147, %150 : vector<16x1xf32>
    %152 = math.rsqrt %151 : vector<16x1xf32>
    %153 = vector.broadcast %152 : vector<16x1xf32> to vector<16x32xf32>
    %154 = arith.mulf %149, %153 : vector<16x32xf32>
    %155 = vector.broadcast %130 : vector<1x32xf32> to vector<16x32xf32>
    %156 = arith.mulf %154, %155 : vector<16x32xf32>
    %157 = vector.broadcast %131 : vector<1x32xf32> to vector<16x32xf32>
    %158 = arith.addf %156, %157 : vector<16x32xf32>
    %159 = arith.truncf %158 : vector<16x32xf32> to vector<16x32xbf16>
    %cst_54 = arith.constant dense<0.000000e+00> : vector<16x64xf32>
    %160 = tpu.matmul %159, %12, %cst_54 {dimension_numbers = #tpu.dot_dimension_numbers<[1], [0], [0], [1], [0, 0, 1, 1], [], []>} : vector<16x32xbf16>, vector<32x64xbf16>, vector<16x64xf32> -> vector<16x64xf32>
    %161 = vector.broadcast %14 : vector<1x64xf32> to vector<16x64xf32>
    %162 = arith.addf %160, %161 : vector<16x64xf32>
    %cst_55 = arith.constant 0.000000e+00 : f32
    %163 = vector.broadcast %cst_55 : f32 to vector<16x64xf32>
    %164 = arith.maximumf %162, %163 : vector<16x64xf32>
    %165 = arith.truncf %164 : vector<16x64xf32> to vector<16x64xbf16>
    %cst_56 = arith.constant dense<0.000000e+00> : vector<16x32xf32>
    %166 = tpu.matmul %165, %16, %cst_56 {dimension_numbers = #tpu.dot_dimension_numbers<[1], [0], [0], [1], [0, 0, 1, 1], [], []>} : vector<16x64xbf16>, vector<64x32xbf16>, vector<16x32xf32> -> vector<16x32xf32>
    %167 = vector.broadcast %129 : vector<1x32xf32> to vector<16x32xf32>
    %168 = arith.addf %166, %167 : vector<16x32xf32>
    %169 = arith.addf %158, %168 : vector<16x32xf32>
    %cst_57 = arith.constant dense<0.000000e+00> : vector<16xf32>
    %170 = vector.multi_reduction <add>, %169, %cst_57 [1] : vector<16x32xf32> to vector<16xf32>
    %171 = vector.shape_cast %170 : vector<16xf32> to vector<16x1xf32>
    %cst_58 = arith.constant 3.200000e+01 : f32
    %172 = vector.broadcast %cst_58 : f32 to vector<16x1xf32>
    %173 = arith.divf %171, %172 : vector<16x1xf32>
    %174 = vector.broadcast %173 : vector<16x1xf32> to vector<16x32xf32>
    %175 = arith.subf %169, %174 : vector<16x32xf32>
    %176 = arith.mulf %175, %175 : vector<16x32xf32>
    %cst_59 = arith.constant dense<0.000000e+00> : vector<16xf32>
    %177 = vector.multi_reduction <add>, %176, %cst_59 [1] : vector<16x32xf32> to vector<16xf32>
    %178 = vector.shape_cast %177 : vector<16xf32> to vector<16x1xf32>
    %cst_60 = arith.constant 3.200000e+01 : f32
    %179 = vector.broadcast %cst_60 : f32 to vector<16x1xf32>
    %180 = arith.divf %178, %179 : vector<16x1xf32>
    %181 = vector.broadcast %173 : vector<16x1xf32> to vector<16x32xf32>
    %182 = arith.subf %169, %181 : vector<16x32xf32>
    %cst_61 = arith.constant 9.99999974E-6 : f32
    %183 = vector.broadcast %cst_61 : f32 to vector<16x1xf32>
    %184 = arith.addf %180, %183 : vector<16x1xf32>
    %185 = math.rsqrt %184 : vector<16x1xf32>
    %186 = vector.broadcast %185 : vector<16x1xf32> to vector<16x32xf32>
    %187 = arith.mulf %182, %186 : vector<16x32xf32>
    %188 = vector.broadcast %132 : vector<1x32xf32> to vector<16x32xf32>
    %189 = arith.mulf %187, %188 : vector<16x32xf32>
    %190 = vector.broadcast %133 : vector<1x32xf32> to vector<16x32xf32>
    %191 = arith.addf %189, %190 : vector<16x32xf32>
    %192 = vector.shape_cast %191 : vector<16x32xf32> to vector<2x8x32xf32>
    %c0_62 = arith.constant 0 : index
    %c0_63 = arith.constant 0 : index
    %c0_64 = arith.constant 0 : index
    %193 = vector.load %arg13[%c0_62, %c0_63, %c0_64] : memref<2x8x32xf32, #tpu.memory_space<vmem>>, vector<2x8x32xf32>
    tpu.vector_store %arg13[%c0_62, %c0_63, %c0_64], %192 {strides = array<i32>} : memref<2x8x32xf32, #tpu.memory_space<vmem>>, vector<2x8x32xf32>,
    %c1_i32 = arith.constant 1 : i32
    %194 = arith.cmpi eq, %arg0, %c1_i32 : i32
    %195 = arith.extui %194 : i1 to i32
    %c0_i32_65 = arith.constant 0 : i32
    %196 = arith.cmpi ne, %195, %c0_i32_65 : i32
    scf.if %196 {
      %197 = vector.shape_cast %191 : vector<16x32xf32> to vector<2x8x32xf32>
      %198 = vector.extract_strided_slice %197 {offsets = [0, 0, 0], sizes = [2, 1, 32], strides = [1, 1, 1]} : vector<2x8x32xf32> to vector<2x1x32xf32>
      %199 = vector.shape_cast %198 : vector<2x1x32xf32> to vector<2x32xf32>
      %200 = arith.truncf %199 : vector<2x32xf32> to vector<2x32xbf16>
      %c0_66 = arith.constant 0 : index
      %c0_67 = arith.constant 0 : index
      %201 = vector.load %arg10[%c0_66, %c0_67] : memref<32x2xbf16, #tpu.memory_space<vmem>>, vector<32x2xbf16>
      %cst_68 = arith.constant dense<0.000000e+00> : vector<2x2xf32>
      %202 = tpu.matmul %200, %201, %cst_68 {dimension_numbers = #tpu.dot_dimension_numbers<[1], [0], [0], [1], [0, 0, 1, 1], [], []>} : vector<2x32xbf16>, vector<32x2xbf16>, vector<2x2xf32> -> vector<2x2xf32>
      %c0_69 = arith.constant 0 : index
      %c0_70 = arith.constant 0 : index
      %203 = vector.load %arg11[%c0_69, %c0_70] : memref<1x2xf32, #tpu.memory_space<vmem>>, vector<1x2xf32>
      %204 = vector.broadcast %203 : vector<1x2xf32> to vector<2x2xf32>
      %205 = arith.addf %202, %204 : vector<2x2xf32>
      %c0_71 = arith.constant 0 : index
      %c0_72 = arith.constant 0 : index
      %206 = vector.load %arg12[%c0_71, %c0_72] : memref<2x2xf32, #tpu.memory_space<vmem>>, vector<2x2xf32>
      tpu.vector_store %arg12[%c0_71, %c0_72], %205 {strides = array<i32>} : memref<2x2xf32, #tpu.memory_space<vmem>>, vector<2x2xf32>,
    } else {
    }
    return
  }
  func.func @transform_0(%arg0: i32) -> (i32, i32, i32) {
    %c0_i32 = arith.constant 0 : i32
    %c0_i32_0 = arith.constant 0 : i32
    %c0_i32_1 = arith.constant 0 : i32
    %c0_i32_2 = arith.constant 0 : i32
    return %c0_i32, %c0_i32_0, %c0_i32_1 : i32, i32, i32
  }
  func.func @transform_1(%arg0: i32) -> (i32, i32, i32) {
    %c0_i32 = arith.constant 0 : i32
    %c0_i32_0 = arith.constant 0 : i32
    %c0_i32_1 = arith.constant 0 : i32
    %c0_i32_2 = arith.constant 0 : i32
    return %c0_i32, %c0_i32_0, %c0_i32_1 : i32, i32, i32
  }
  func.func @transform_2(%arg0: i32) -> (i32, i32, i32) {
    %c0_i32 = arith.constant 0 : i32
    %c0_i32_0 = arith.constant 0 : i32
    %c0_i32_1 = arith.constant 0 : i32
    return %arg0, %c0_i32, %c0_i32_0 : i32, i32, i32
  }
  func.func @transform_3(%arg0: i32) -> (i32, i32, i32) {
    %c0_i32 = arith.constant 0 : i32
    %c0_i32_0 = arith.constant 0 : i32
    %c0_i32_1 = arith.constant 0 : i32
    return %arg0, %c0_i32, %c0_i32_0 : i32, i32, i32
  }
  func.func @transform_4(%arg0: i32) -> (i32, i32, i32) {
    %c0_i32 = arith.constant 0 : i32
    %c0_i32_0 = arith.constant 0 : i32
    %c0_i32_1 = arith.constant 0 : i32
    return %arg0, %c0_i32, %c0_i32_0 : i32, i32, i32
  }
  func.func @transform_5(%arg0: i32) -> (i32, i32, i32) {
    %c0_i32 = arith.constant 0 : i32
    %c0_i32_0 = arith.constant 0 : i32
    %c0_i32_1 = arith.constant 0 : i32
    return %arg0, %c0_i32, %c0_i32_0 : i32, i32, i32
  }
  func.func @transform_6(%arg0: i32) -> (i32, i32, i32) {
    %c0_i32 = arith.constant 0 : i32
    %c0_i32_0 = arith.constant 0 : i32
    %c0_i32_1 = arith.constant 0 : i32
    return %arg0, %c0_i32, %c0_i32_0 : i32, i32, i32
  }
  func.func @transform_7(%arg0: i32) -> (i32, i32, i32) {
    %c0_i32 = arith.constant 0 : i32
    %c0_i32_0 = arith.constant 0 : i32
    %c0_i32_1 = arith.constant 0 : i32
    return %arg0, %c0_i32, %c0_i32_0 : i32, i32, i32
  }
  func.func @transform_8(%arg0: i32) -> (i32, i32, i32) {
    %c0_i32 = arith.constant 0 : i32
    %c0_i32_0 = arith.constant 0 : i32
    %c0_i32_1 = arith.constant 0 : i32
    return %arg0, %c0_i32, %c0_i32_0 : i32, i32, i32
  }
  func.func @transform_9(%arg0: i32) -> (i32, i32) {
    %c0_i32 = arith.constant 0 : i32
    %c0_i32_0 = arith.constant 0 : i32
    %c0_i32_1 = arith.constant 0 : i32
    return %c0_i32, %c0_i32_0 : i32, i32
  }
  func.func @transform_10(%arg0: i32) -> (i32, i32) {
    %c0_i32 = arith.constant 0 : i32
    %c0_i32_0 = arith.constant 0 : i32
    %c0_i32_1 = arith.constant 0 : i32
    return %c0_i32, %c0_i32_0 : i32, i32
  }
  func.func @transform_11(%arg0: i32) -> (i32, i32) {
    %c0_i32 = arith.constant 0 : i32
    %c0_i32_0 = arith.constant 0 : i32
    %c0_i32_1 = arith.constant 0 : i32
    return %c0_i32, %c0_i32_0 : i32, i32
  }
}

</mosaic_0001>

<llo_original>
// kernel: tpu_custom_call.1
$region0: #{tpu_custom_call.1}
  #allocation0 [shape = 'u32[]', space=smem, size = 0x4, offset = 0x4, fixed_abs, tag = 'smem constant byte address 0x4 - core index']
  #allocation1 [shape = 'u32[72,128]{1,0:T(1,128)}', space=vmem, size = 0x9000, scoped, tag = 'internal scratch']
  #allocation2 [shape = 'f32[2,8,32]{2,1,0:T(8,128)}', space=vmem, size = 0x2000, scoped, tag = 'scratch operand']
  %s0 = inlined_call_operand.vmem [shape: f32[2,8,32], index: 0, kind: input, shape index: {}]
  %s1 = inlined_call_operand.hbm [shape: f32[2,1,8], index: 1, kind: input, shape index: {}]
  %s2 = inlined_call_operand.vmem [shape: bf16[2,32,96], index: 2, kind: input, shape index: {}]
  %s3 = inlined_call_operand.hbm [shape: f32[2,1,96], index: 3, kind: input, shape index: {}]
  %s4 = inlined_call_operand.vmem [shape: bf16[2,32,32], index: 4, kind: input, shape index: {}]
  %s5 = inlined_call_operand.vmem [shape: bf16[2,32,64], index: 5, kind: input, shape index: {}]
  %s6 = inlined_call_operand.vmem [shape: f32[2,1,64], index: 6, kind: input, shape index: {}]
  %s7 = inlined_call_operand.vmem [shape: bf16[2,64,32], index: 7, kind: input, shape index: {}]
  %s8 = inlined_call_operand.hbm [shape: f32[2,8,32], index: 8, kind: input, shape index: {}]
  %s9 = inlined_call_operand.vmem [shape: bf16[32,2], index: 9, kind: input, shape index: {}]
  %s10 = inlined_call_operand.vmem [shape: f32[1,2], index: 10, kind: input, shape index: {}]
  %s11 = inlined_call_operand.hbm [shape: f32[2,2], index: 11, kind: output, shape index: {}]
  %s12 = sld [smem:[#allocation0]]
  $region97: #{tpu_custom_call.1} parent=0
    _
  %s14 = ssub.s32 1, %s12
  %s15 = scalar_select 0, %s14, %s12
  $region1: #{tpu_custom_call.1} parent=0
    #allocation3 [shape = 'u8[1024]{0}', space=vmem, size = 0x400, scoped, tag = 'input window, operand 1, single buffered']
    #allocation4 [shape = 's32[2]{0}', space=sflag, size = 0x8, scoped, tag = 'scoped memory for tpu_custom_call.1']
    #allocation5 [shape = 's32[2]{0}', space=sflag, size = 0x8, scoped, tag = 'scoped memory for tpu_custom_call.1']
    #allocation6 [shape = 'u8[1024]{0}', space=vmem, size = 0x400, scoped, tag = 'input window, operand 3']
    #allocation7 [shape = 's32[2]{0}', space=sflag, size = 0x8, scoped, tag = 'scoped memory for tpu_custom_call.1']
    #allocation8 [shape = 'u8[8192]{0}', space=vmem, size = 0x2000, scoped, tag = 'input window, operand 8']
    #allocation9 [shape = 'u8[1024]{0}', space=vmem, size = 0x400, scoped, tag = 'output window, operand 0, single buffered']
    %16 = vsyncpa [#allocation4], 0
    %17 = vsyncpa [#allocation7], 0
    %s18 = scalar_lea.sflag [#allocation7], 1
    %19 = vsyncpa %s18, 0
    %20 = vsyncpa [#allocation5], 0
    loop: start=0, step=1, limit=4
    $region2: #{tpu_custom_call.1} parent=1 // loop_pre_header
      _
    $region3: #{tpu_custom_call.1} parent=1 // loop_header
      %s22 = sphi 0, %s26
      %p23 = scmp.ge.s32.totalorder %s22, 4
      %s30 = sphi 0, %s30
      %s32 = sphi 0, %s30
      %s33 = sphi 0, %s32
      %s47 = sphi 0, %s33
      %s51 = sphi 0, %s51
      %s53 = sphi 0, %s51
      %s54 = sphi 0, %s53
      %s68 = sphi 0, %s54
      %s74 = sphi 0, %s76
      %s77 = sphi 0, %s74
      %s78 = sphi 0, %s77
      %s94 = sphi 0, %s78
      %s100 = sphi 0, %s102
      %s103 = sphi 0, %s100
      %s104 = sphi 0, %s103
      %s120 = sphi 0, %s104
      %s126 = sphi 0, %s128
      %s129 = sphi 0, %s126
      %s130 = sphi 0, %s129
      %s146 = sphi 0, %s130
      %s152 = sphi 0, %s154
      %s155 = sphi 0, %s152
      %s156 = sphi 0, %s155
      %s172 = sphi 0, %s156
      %s178 = sphi 0, %s180
      %s181 = sphi 0, %s178
      %s182 = sphi 0, %s181
      %s198 = sphi 0, %s182
      %s204 = sphi 0, %s206
      %s207 = sphi 0, %s204
      %s208 = sphi 0, %s207
      %s224 = sphi 0, %s208
      %s230 = sphi 0, %s232
      %s233 = sphi 0, %s230
      %s234 = sphi 0, %s233
      %s250 = sphi 0, %s234
      %s254 = sphi 0, %s254
      %s256 = sphi 0, %s254
      %s257 = sphi 0, %s256
      %s271 = sphi 0, %s257
      %s275 = sphi 0, %s275
      %s277 = sphi 0, %s275
      %s278 = sphi 0, %s277
      %s292 = sphi 0, %s278
      %s296 = sphi 0, %s296
      %s298 = sphi 0, %s296
      %s299 = sphi 0, %s298
      %s313 = sphi 0, %s299
    $region4: #{tpu_custom_call.1} parent=1 // loop_header_branch
      %25 = sbr.rel (%p23) target = $region8
    $region5: #{tpu_custom_call.1} parent=1 // loop_body
      %s27 = ssub.s32 %s22, 1
      %s28 = ssub.s32 %s22, 2
      %s29 = sadd.s32 %s22, 1
      %s31 = sadd.s32 %s30, 1
      %p34 = scmp.eq.s32.totalorder %s22, 1
      %p35 = scmp.ne.s32.totalorder %s30, %s32
      %p36 = scmp.eq.s32.totalorder %s22, 0
      %p37 = por %p35, %p36
      %p38 = scmp.ne.s32.totalorder %s30, %s32
      %p39 = scmp.eq.s32.totalorder %s27, 1
      %p40 = por %p38, %p39
      %p41 = scmp.ne.s32.totalorder %s32, %s33
      %p42 = scmp.eq.s32.totalorder %s27, 0
      %p43 = por %p41, %p42
      %p44 = scmp.ne.s32.totalorder %s32, %s33
      %p45 = scmp.eq.s32.totalorder %s28, 1
      %p46 = por %p44, %p45
      %p48 = scmp.ne.s32.totalorder %s33, %s47
      %p49 = scmp.eq.s32.totalorder %s28, 0
      %p50 = por %p48, %p49
      %s52 = sadd.s32 %s51, 1
      %p55 = scmp.eq.s32.totalorder %s22, 1
      %p56 = scmp.ne.s32.totalorder %s51, %s53
      %p57 = scmp.eq.s32.totalorder %s22, 0
      %p58 = por %p56, %p57
      %p59 = scmp.ne.s32.totalorder %s51, %s53
      %p60 = scmp.eq.s32.totalorder %s27, 1
      %p61 = por %p59, %p60
      %p62 = scmp.ne.s32.totalorder %s53, %s54
      %p63 = scmp.eq.s32.totalorder %s27, 0
      %p64 = por %p62, %p63
      %p65 = scmp.ne.s32.totalorder %s53, %s54
      %p66 = scmp.eq.s32.totalorder %s28, 1
      %p67 = por %p65, %p66
      %p69 = scmp.ne.s32.totalorder %s54, %s68
      %p70 = scmp.eq.s32.totalorder %s28, 0
      %p71 = por %p69, %p70
      %s72 = ssub.s32 %s22, %s29
      %p73 = scmp.eq.s32.totalorder %s72, 0
      %s75 = sadd.s32 %s74, 1
      %s76 = scalar_select %p73, %s74, %s75
      %p79 = pneg %p73
      %p80 = scmp.eq.s32.totalorder %s22, 1
      %p81 = por %p79, %p80
      %p82 = scmp.ne.s32.totalorder %s74, %s77
      %p83 = scmp.eq.s32.totalorder %s22, 0
      %p84 = por %p82, %p83
      %p85 = scmp.ne.s32.totalorder %s74, %s77
      %p86 = scmp.eq.s32.totalorder %s27, 1
      %p87 = por %p85, %p86
      %p88 = scmp.ne.s32.totalorder %s77, %s78
      %p89 = scmp.eq.s32.totalorder %s27, 0
      %p90 = por %p88, %p89
      %p91 = scmp.ne.s32.totalorder %s77, %s78
      %p92 = scmp.eq.s32.totalorder %s28, 1
      %p93 = por %p91, %p92
      %p95 = scmp.ne.s32.totalorder %s78, %s94
      %p96 = scmp.eq.s32.totalorder %s28, 0
      %p97 = por %p95, %p96
      %s98 = ssub.s32 %s22, %s29
      %p99 = scmp.eq.s32.totalorder %s98, 0
      %s101 = sadd.s32 %s100, 1
      %s102 = scalar_select %p99, %s100, %s101
      %p105 = pneg %p99
      %p106 = scmp.eq.s32.totalorder %s22, 1
      %p107 = por %p105, %p106
      %p108 = scmp.ne.s32.totalorder %s100, %s103
      %p109 = scmp.eq.s32.totalorder %s22, 0
      %p110 = por %p108, %p109
      %p111 = scmp.ne.s32.totalorder %s100, %s103
      %p112 = scmp.eq.s32.totalorder %s27, 1
      %p113 = por %p111, %p112
      %p114 = scmp.ne.s32.totalorder %s103, %s104
      %p115 = scmp.eq.s32.totalorder %s27, 0
      %p116 = por %p114, %p115
      %p117 = scmp.ne.s32.totalorder %s103, %s104
      %p118 = scmp.eq.s32.totalorder %s28, 1
      %p119 = por %p117, %p118
      %p121 = scmp.ne.s32.totalorder %s104, %s120
      %p122 = scmp.eq.s32.totalorder %s28, 0
      %p123 = por %p121, %p122
      %s124 = ssub.s32 %s22, %s29
      %p125 = scmp.eq.s32.totalorder %s124, 0
      %s127 = sadd.s32 %s126, 1
      %s128 = scalar_select %p125, %s126, %s127
      %p131 = pneg %p125
      %p132 = scmp.eq.s32.totalorder %s22, 1
      %p133 = por %p131, %p132
      %p134 = scmp.ne.s32.totalorder %s126, %s129
      %p135 = scmp.eq.s32.totalorder %s22, 0
      %p136 = por %p134, %p135
      %p137 = scmp.ne.s32.totalorder %s126, %s129
      %p138 = scmp.eq.s32.totalorder %s27, 1
      %p139 = por %p137, %p138
      %p140 = scmp.ne.s32.totalorder %s129, %s130
      %p141 = scmp.eq.s32.totalorder %s27, 0
      %p142 = por %p140, %p141
      %p143 = scmp.ne.s32.totalorder %s129, %s130
      %p144 = scmp.eq.s32.totalorder %s28, 1
      %p145 = por %p143, %p144
      %p147 = scmp.ne.s32.totalorder %s130, %s146
      %p148 = scmp.eq.s32.totalorder %s28, 0
      %p149 = por %p147, %p148
      %s150 = ssub.s32 %s22, %s29
      %p151 = scmp.eq.s32.totalorder %s150, 0
      %s153 = sadd.s32 %s152, 1
      %s154 = scalar_select %p151, %s152, %s153
      %p157 = pneg %p151
      %p158 = scmp.eq.s32.totalorder %s22, 1
      %p159 = por %p157, %p158
      %p160 = scmp.ne.s32.totalorder %s152, %s155
      %p161 = scmp.eq.s32.totalorder %s22, 0
      %p162 = por %p160, %p161
      %p163 = scmp.ne.s32.totalorder %s152, %s155
      %p164 = scmp.eq.s32.totalorder %s27, 1
      %p165 = por %p163, %p164
      %p166 = scmp.ne.s32.totalorder %s155, %s156
      %p167 = scmp.eq.s32.totalorder %s27, 0
      %p168 = por %p166, %p167
      %p169 = scmp.ne.s32.totalorder %s155, %s156
      %p170 = scmp.eq.s32.totalorder %s28, 1
      %p171 = por %p169, %p170
      %p173 = scmp.ne.s32.totalorder %s156, %s172
      %p174 = scmp.eq.s32.totalorder %s28, 0
      %p175 = por %p173, %p174
      %s176 = ssub.s32 %s22, %s29
      %p177 = scmp.eq.s32.totalorder %s176, 0
      %s179 = sadd.s32 %s178, 1
      %s180 = scalar_select %p177, %s178, %s179
      %p183 = pneg %p177
      %p184 = scmp.eq.s32.totalorder %s22, 1
      %p185 = por %p183, %p184
      %p186 = scmp.ne.s32.totalorder %s178, %s181
      %p187 = scmp.eq.s32.totalorder %s22, 0
      %p188 = por %p186, %p187
      %p189 = scmp.ne.s32.totalorder %s178, %s181
      %p190 = scmp.eq.s32.totalorder %s27, 1
      %p191 = por %p189, %p190
      %p192 = scmp.ne.s32.totalorder %s181, %s182
      %p193 = scmp.eq.s32.totalorder %s27, 0
      %p194 = por %p192, %p193
      %p195 = scmp.ne.s32.totalorder %s181, %s182
      %p196 = scmp.eq.s32.totalorder %s28, 1
      %p197 = por %p195, %p196
      %p199 = scmp.ne.s32.totalorder %s182, %s198
      %p200 = scmp.eq.s32.totalorder %s28, 0
      %p201 = por %p199, %p200
      %s202 = ssub.s32 %s22, %s29
      %p203 = scmp.eq.s32.totalorder %s202, 0
      %s205 = sadd.s32 %s204, 1
      %s206 = scalar_select %p203, %s204, %s205
      %p209 = pneg %p203
      %p210 = scmp.eq.s32.totalorder %s22, 1
      %p211 = por %p209, %p210
      %p212 = scmp.ne.s32.totalorder %s204, %s207
      %p213 = scmp.eq.s32.totalorder %s22, 0
      %p214 = por %p212, %p213
      %p215 = scmp.ne.s32.totalorder %s204, %s207
      %p216 = scmp.eq.s32.totalorder %s27, 1
      %p217 = por %p215, %p216
      %p218 = scmp.ne.s32.totalorder %s207, %s208
      %p219 = scmp.eq.s32.totalorder %s27, 0
      %p220 = por %p218, %p219
      %p221 = scmp.ne.s32.totalorder %s207, %s208
      %p222 = scmp.eq.s32.totalorder %s28, 1
      %p223 = por %p221, %p222
      %p225 = scmp.ne.s32.totalorder %s208, %s224
      %p226 = scmp.eq.s32.totalorder %s28, 0
      %p227 = por %p225, %p226
      %s228 = ssub.s32 %s22, %s29
      %p229 = scmp.eq.s32.totalorder %s228, 0
      %s231 = sadd.s32 %s230, 1
      %s232 = scalar_select %p229, %s230, %s231
      %p235 = pneg %p229
      %p236 = scmp.eq.s32.totalorder %s22, 1
      %p237 = por %p235, %p236
      %p238 = scmp.ne.s32.totalorder %s230, %s233
      %p239 = scmp.eq.s32.totalorder %s22, 0
      %p240 = por %p238, %p239
      %p241 = scmp.ne.s32.totalorder %s230, %s233
      %p242 = scmp.eq.s32.totalorder %s27, 1
      %p243 = por %p241, %p242
      %p244 = scmp.ne.s32.totalorder %s233, %s234
      %p245 = scmp.eq.s32.totalorder %s27, 0
      %p246 = por %p244, %p245
      %p247 = scmp.ne.s32.totalorder %s233, %s234
      %p248 = scmp.eq.s32.totalorder %s28, 1
      %p249 = por %p247, %p248
      %p251 = scmp.ne.s32.totalorder %s234, %s250
      %p252 = scmp.eq.s32.totalorder %s28, 0
      %p253 = por %p251, %p252
      %s255 = sadd.s32 %s254, 1
      %p258 = scmp.eq.s32.totalorder %s22, 1
      %p259 = scmp.ne.s32.totalorder %s254, %s256
      %p260 = scmp.eq.s32.totalorder %s22, 0
      %p261 = por %p259, %p260
      %p262 = scmp.ne.s32.totalorder %s254, %s256
      %p263 = scmp.eq.s32.totalorder %s27, 1
      %p264 = por %p262, %p263
      %p265 = scmp.ne.s32.totalorder %s256, %s257
      %p266 = scmp.eq.s32.totalorder %s27, 0
      %p267 = por %p265, %p266
      %p268 = scmp.ne.s32.totalorder %s256, %s257
      %p269 = scmp.eq.s32.totalorder %s28, 1
      %p270 = por %p268, %p269
      %p272 = scmp.ne.s32.totalorder %s257, %s271
      %p273 = scmp.eq.s32.totalorder %s28, 0
      %p274 = por %p272, %p273
      %s276 = sadd.s32 %s275, 1
      %p279 = scmp.eq.s32.totalorder %s22, 1
      %p280 = scmp.ne.s32.totalorder %s275, %s277
      %p281 = scmp.eq.s32.totalorder %s22, 0
      %p282 = por %p280, %p281
      %p283 = scmp.ne.s32.totalorder %s275, %s277
      %p284 = scmp.eq.s32.totalorder %s27, 1
      %p285 = por %p283, %p284
      %p286 = scmp.ne.s32.totalorder %s277, %s278
      %p287 = scmp.eq.s32.totalorder %s27, 0
      %p288 = por %p286, %p287
      %p289 = scmp.ne.s32.totalorder %s277, %s278
      %p290 = scmp.eq.s32.totalorder %s28, 1
      %p291 = por %p289, %p290
      %p293 = scmp.ne.s32.totalorder %s278, %s292
      %p294 = scmp.eq.s32.totalorder %s28, 0
      %p295 = por %p293, %p294
      %s297 = sadd.s32 %s296, 1
      %p300 = scmp.eq.s32.totalorder %s22, 1
      %p301 = scmp.ne.s32.totalorder %s296, %s298
      %p302 = scmp.eq.s32.totalorder %s22, 0
      %p303 = por %p301, %p302
      %p304 = scmp.ne.s32.totalorder %s296, %s298
      %p305 = scmp.eq.s32.totalorder %s27, 1
      %p306 = por %p304, %p305
      %p307 = scmp.ne.s32.totalorder %s298, %s299
      %p308 = scmp.eq.s32.totalorder %s27, 0
      %p309 = por %p307, %p308
      %p310 = scmp.ne.s32.totalorder %s298, %s299
      %p311 = scmp.eq.s32.totalorder %s28, 1
      %p312 = por %p310, %p311
      %p314 = scmp.ne.s32.totalorder %s299, %s313
      %p315 = scmp.eq.s32.totalorder %s28, 0
      %p316 = por %p314, %p315
      %p317 = scmp.le.s32.totalorder 1, %s22
      %p318 = scmp.lt.s32.totalorder %s22, 3
      %p319 = pnand %p317, %p318
      %p320 = pneg %p319
      // Predicated region
      $region9: #{tpu_custom_call.1} parent=5 // pred_check
        _
      $region10: #{tpu_custom_call.1} parent=5 // pred_check_branch
        %322 = sbr.rel (%p319) target = $region12
      $region11: #{tpu_custom_call.1} parent=5 // pred_region
        %s323 = ssub.s32 %s22, 1
        // Predicated region
        $region13: #{tpu_custom_call.1} parent=11 // pred_check
          %p324 = pneg %p43
        $region14: #{tpu_custom_call.1} parent=11 // pred_check_branch
          %326 = sbr.rel (%p324) target = $region16
        $region15: #{tpu_custom_call.1} parent=11 // pred_region
          _
        $region16: #{tpu_custom_call.1} parent=11 // pred_fallthru
          _
        // Predicated region
        $region17: #{tpu_custom_call.1} parent=11 // pred_check
          %p327 = pneg %p64
        $region18: #{tpu_custom_call.1} parent=11 // pred_check_branch
          %329 = sbr.rel (%p327) target = $region20
        $region19: #{tpu_custom_call.1} parent=11 // pred_region
          %331 = vsyncadd [#allocation4], 0
          %s332 = sshll.u32 %s1, 4
          %s333 = int_to_ptr.hbm [resolvable:$true] %s332
          %s334 = sshll.u32 [#allocation3], 4
          %s335 = int_to_ptr.vmem [resolvable:$true] %s334
          %340 = dma.hbm_to_vmem [thread:$0]  %s333, 32, %s335, [#allocation4], 16, 16, 1
        $region20: #{tpu_custom_call.1} parent=11 // pred_fallthru
          _
        // Predicated region
        $region21: #{tpu_custom_call.1} parent=11 // pred_check
          %p341 = pneg %p267
        $region22: #{tpu_custom_call.1} parent=11 // pred_check_branch
          %343 = sbr.rel (%p341) target = $region24
        $region23: #{tpu_custom_call.1} parent=11 // pred_region
          _
        $region24: #{tpu_custom_call.1} parent=11 // pred_fallthru
          _
        // Predicated region
        $region25: #{tpu_custom_call.1} parent=11 // pred_check
          %p344 = pneg %p288
        $region26: #{tpu_custom_call.1} parent=11 // pred_check_branch
          %346 = sbr.rel (%p344) target = $region28
        $region27: #{tpu_custom_call.1} parent=11 // pred_region
          _
        $region28: #{tpu_custom_call.1} parent=11 // pred_fallthru
          _
      $region12: #{tpu_custom_call.1} parent=5 // pred_fallthru
        _
      %p347 = scmp.lt.s32.totalorder %s22, 2
      // Predicated region
      $region29: #{tpu_custom_call.1} parent=5 // pred_check
        %p348 = pneg %p347
      $region30: #{tpu_custom_call.1} parent=5 // pred_check_branch
        %350 = sbr.rel (%p348) target = $region32
      $region31: #{tpu_custom_call.1} parent=5 // pred_region
        // Predicated region
        $region33: #{tpu_custom_call.1} parent=31 // pred_check
          %p351 = pneg %p84
        $region34: #{tpu_custom_call.1} parent=31 // pred_check_branch
          %353 = sbr.rel (%p351) target = $region36
        $region35: #{tpu_custom_call.1} parent=31 // pred_region
          %p354 = scmp.lt.s32.totalorder %s22, 1
          %s355 = scalar_select %p354, %s22, 1
          %s356 = smul.addr %s355, 4
          %s357 = smul.addr %s356, 4
          %s358 = scalar_lea.vmem %s2, %s357
        $region36: #{tpu_custom_call.1} parent=31 // pred_fallthru
          _
        // Predicated region
        $region37: #{tpu_custom_call.1} parent=31 // pred_check
          %p359 = pneg %p110
        $region38: #{tpu_custom_call.1} parent=31 // pred_check_branch
          %361 = sbr.rel (%p359) target = $region40
        $region39: #{tpu_custom_call.1} parent=31 // pred_region
          %s362 = sand.u32 %s22, 1
          %s363 = scalar_lea.sflag [#allocation7], %s362
          %s364 = sand.u32 %s100, 1
          %s365 = scalar_lea.vmem [#allocation6], %s364
          %367 = vsyncadd %s363, 0
          %s368 = scalar_lea.hbm %s3, %s22
          %s370 = sshll.u32 %s368, 4
          %s371 = int_to_ptr.hbm [resolvable:$true] %s370
          %s372 = sshll.u32 %s365, 4
          %s373 = int_to_ptr.vmem [resolvable:$true] %s372
          %375 = dma.hbm_to_vmem [thread:$0]  %s371, 16, %s373, %s363
        $region40: #{tpu_custom_call.1} parent=31 // pred_fallthru
          _
        // Predicated region
        $region41: #{tpu_custom_call.1} parent=31 // pred_check
          %p376 = pneg %p136
        $region42: #{tpu_custom_call.1} parent=31 // pred_check_branch
          %378 = sbr.rel (%p376) target = $region44
        $region43: #{tpu_custom_call.1} parent=31 // pred_region
          %p379 = scmp.lt.s32.totalorder %s22, 1
          %s380 = scalar_select %p379, %s22, 1
          %s381 = smul.addr %s380, 4
          %s382 = smul.addr %s381, 4
          %s383 = scalar_lea.vmem %s4, %s382
        $region44: #{tpu_custom_call.1} parent=31 // pred_fallthru
          _
        // Predicated region
        $region45: #{tpu_custom_call.1} parent=31 // pred_check
          %p384 = pneg %p162
        $region46: #{tpu_custom_call.1} parent=31 // pred_check_branch
          %386 = sbr.rel (%p384) target = $region48
        $region47: #{tpu_custom_call.1} parent=31 // pred_region
          %p387 = scmp.lt.s32.totalorder %s22, 1
          %s388 = scalar_select %p387, %s22, 1
          %s389 = smul.addr %s388, 4
          %s390 = smul.addr %s389, 4
          %s391 = scalar_lea.vmem %s5, %s390
        $region48: #{tpu_custom_call.1} parent=31 // pred_fallthru
          _
        // Predicated region
        $region49: #{tpu_custom_call.1} parent=31 // pred_check
          %p392 = pneg %p188
        $region50: #{tpu_custom_call.1} parent=31 // pred_check_branch
          %394 = sbr.rel (%p392) target = $region52
        $region51: #{tpu_custom_call.1} parent=31 // pred_region
          %p395 = scmp.lt.s32.totalorder %s22, 1
          %s396 = scalar_select %p395, %s22, 1
          %s397 = scalar_lea.vmem %s6, %s396
        $region52: #{tpu_custom_call.1} parent=31 // pred_fallthru
          _
        // Predicated region
        $region53: #{tpu_custom_call.1} parent=31 // pred_check
          %p398 = pneg %p214
        $region54: #{tpu_custom_call.1} parent=31 // pred_check_branch
          %400 = sbr.rel (%p398) target = $region56
        $region55: #{tpu_custom_call.1} parent=31 // pred_region
          %p401 = scmp.lt.s32.totalorder %s22, 1
          %s402 = scalar_select %p401, %s22, 1
          %s403 = smul.addr %s402, 8
          %s404 = smul.addr %s403, 4
          %s405 = scalar_lea.vmem %s7, %s404
        $region56: #{tpu_custom_call.1} parent=31 // pred_fallthru
          _
        // Predicated region
        $region57: #{tpu_custom_call.1} parent=31 // pred_check
          %p406 = pneg %p240
        $region58: #{tpu_custom_call.1} parent=31 // pred_check_branch
          %408 = sbr.rel (%p406) target = $region60
        $region59: #{tpu_custom_call.1} parent=31 // pred_region
          %s409 = sand.u32 %s22, 1
          %s410 = scalar_lea.sflag [#allocation7], %s409
          %s411 = sand.u32 %s230, 1
          %s412 = smul.addr %s411, 8
          %s413 = scalar_lea.vmem [#allocation8], %s412
          %415 = vsyncadd %s410, 0
          %s416 = smul.addr %s22, 8
          %s417 = scalar_lea.hbm %s8, %s416
          %s419 = sshll.u32 %s417, 4
          %s420 = int_to_ptr.hbm [resolvable:$true] %s419
          %s421 = sshll.u32 %s413, 4
          %s422 = int_to_ptr.vmem [resolvable:$true] %s421
          %424 = dma.hbm_to_vmem [thread:$0]  %s420, 128, %s422, %s410
        $region60: #{tpu_custom_call.1} parent=31 // pred_fallthru
          _
      $region32: #{tpu_custom_call.1} parent=5 // pred_fallthru
        _
      %p425 = scmp.le.s32.totalorder 1, %s22
      %p426 = scmp.lt.s32.totalorder %s22, 3
      %p427 = pnand %p425, %p426
      %p428 = pneg %p427
      // Predicated region
      $region61: #{tpu_custom_call.1} parent=5 // pred_check
        _
      $region62: #{tpu_custom_call.1} parent=5 // pred_check_branch
        %430 = sbr.rel (%p427) target = $region64
      $region63: #{tpu_custom_call.1} parent=5 // pred_region
        %s431 = ssub.s32 %s22, 1
        // Predicated region
        $region65: #{tpu_custom_call.1} parent=63 // pred_check
          %p432 = pneg %p64
        $region66: #{tpu_custom_call.1} parent=63 // pred_check_branch
          %434 = sbr.rel (%p432) target = $region68
        $region67: #{tpu_custom_call.1} parent=63 // pred_region
          %436 = dma.done [#allocation4], 32
        $region68: #{tpu_custom_call.1} parent=63 // pred_fallthru
          _
        %s437 = sand.u32 %s27, 1
        %s438 = scalar_lea.sflag [#allocation7], %s437
        %s439 = sand.u32 %s103, 1
        %s440 = scalar_lea.vmem [#allocation6], %s439
        // Predicated region
        $region69: #{tpu_custom_call.1} parent=63 // pred_check
          %p441 = pneg %p116
        $region70: #{tpu_custom_call.1} parent=63 // pred_check_branch
          %443 = sbr.rel (%p441) target = $region72
        $region71: #{tpu_custom_call.1} parent=63 // pred_region
          %445 = dma.done %s438, 16
        $region72: #{tpu_custom_call.1} parent=63 // pred_fallthru
          _
        %s446 = sand.u32 %s27, 1
        %s447 = scalar_lea.sflag [#allocation7], %s446
        %s448 = sand.u32 %s233, 1
        %s449 = smul.addr %s448, 8
        %s450 = scalar_lea.vmem [#allocation8], %s449
        // Predicated region
        $region73: #{tpu_custom_call.1} parent=63 // pred_check
          %p451 = pneg %p246
        $region74: #{tpu_custom_call.1} parent=63 // pred_check_branch
          %453 = sbr.rel (%p451) target = $region76
        $region75: #{tpu_custom_call.1} parent=63 // pred_region
          %455 = dma.done %s447, 128
        $region76: #{tpu_custom_call.1} parent=63 // pred_fallthru
          _
        %p456 = pneg %p43
        %p457 = pneg %p40
        %p458 = pneg %p64
        %p459 = pneg %p61
        %p460 = scmp.lt.s32.totalorder %s27, 1
        %s461 = scalar_select %p460, %s27, 1
        %s462 = smul.addr %s461, 4
        %s463 = smul.addr %s462, 4
        %s464 = scalar_lea.vmem %s2, %s463
        %p465 = pneg %p90
        %p466 = pneg %p87
        %s467 = sand.u32 %s27, 1
        %s468 = scalar_lea.sflag [#allocation7], %s467
        %s469 = sand.u32 %s103, 1
        %s470 = scalar_lea.vmem [#allocation6], %s469
        %p471 = pneg %p116
        %p472 = pneg %p113
        %p473 = scmp.lt.s32.totalorder %s27, 1
        %s474 = scalar_select %p473, %s27, 1
        %s475 = smul.addr %s474, 4
        %s476 = smul.addr %s475, 4
        %s477 = scalar_lea.vmem %s4, %s476
        %p478 = pneg %p142
        %p479 = pneg %p139
        %p480 = scmp.lt.s32.totalorder %s27, 1
        %s481 = scalar_select %p480, %s27, 1
        %s482 = smul.addr %s481, 4
        %s483 = smul.addr %s482, 4
        %s484 = scalar_lea.vmem %s5, %s483
        %p485 = pneg %p168
        %p486 = pneg %p165
        %p487 = scmp.lt.s32.totalorder %s27, 1
        %s488 = scalar_select %p487, %s27, 1
        %s489 = scalar_lea.vmem %s6, %s488
        %p490 = pneg %p194
        %p491 = pneg %p191
        %p492 = scmp.lt.s32.totalorder %s27, 1
        %s493 = scalar_select %p492, %s27, 1
        %s494 = smul.addr %s493, 8
        %s495 = smul.addr %s494, 4
        %s496 = scalar_lea.vmem %s7, %s495
        %p497 = pneg %p220
        %p498 = pneg %p217
        %s499 = sand.u32 %s27, 1
        %s500 = scalar_lea.sflag [#allocation7], %s499
        %s501 = sand.u32 %s233, 1
        %s502 = smul.addr %s501, 8
        %s503 = scalar_lea.vmem [#allocation8], %s502
        %p504 = pneg %p246
        %p505 = pneg %p243
        %p506 = pneg %p267
        %p507 = pneg %p264
        %p508 = pneg %p288
        %p509 = pneg %p285
        %p510 = pneg %p309
        %p511 = pneg %p306
        %p512 = scmp.lt.s32.totalorder %s27, 1
        %s513 = scalar_select %p512, %s27, 1
        %s514 = smul.addr %s513, 4
        %s515 = smul.addr %s514, 4
        %s516 = scalar_lea.vmem %s2, %s515
        %p517 = scmp.lt.s32.totalorder %s27, 1
        %s518 = scalar_select %p517, %s27, 1
        %s519 = smul.addr %s518, 4
        %s520 = smul.addr %s519, 4
        %s521 = scalar_lea.vmem %s4, %s520
        %p522 = scmp.lt.s32.totalorder %s27, 1
        %s523 = scalar_select %p522, %s27, 1
        %s524 = smul.addr %s523, 4
        %s525 = smul.addr %s524, 4
        %s526 = scalar_lea.vmem %s5, %s525
        %p527 = scmp.lt.s32.totalorder %s27, 1
        %s528 = scalar_select %p527, %s27, 1
        %s529 = scalar_lea.vmem %s6, %s528
        %p530 = scmp.lt.s32.totalorder %s27, 1
        %s531 = scalar_select %p530, %s27, 1
        %s532 = smul.addr %s531, 8
        %s533 = smul.addr %s532, 4
        %s534 = scalar_lea.vmem %s7, %s533
        %p536 = scmp.eq.s32.totalorder %s27, 0
        // Predicated region
        $region77: #{tpu_custom_call.1} parent=63 // pred_check
          %p537 = pneg %p536
        $region78: #{tpu_custom_call.1} parent=63 // pred_check_branch
          %539 = sbr.rel (%p537) target = $region80
        $region79: #{tpu_custom_call.1} parent=63 // pred_region
          %v540 = vld [vmem:[%s0] sm:$0xff]
          %v541 = vld [vmem:[%s0 + $0x8] sm:$0xff]
          %vm542 = vcmask 261120
          %543 = vst.msk [vmem:[#allocation2] sm:$0xff] %vm542, %v540
          %544 = vst.msk [vmem:[#allocation2 + $0x8] sm:$0xff] %vm542, %v541
        $region80: #{tpu_custom_call.1} parent=63 // pred_fallthru
          _
        %v545 = vld [vmem:[#allocation2] sm:$0xff]
        %v546 = vld [vmem:[#allocation2 + $0x8] sm:$0xff]
        %v547 = vld [vmem:[#allocation3] sm:$0x1]
        %v548 = vld [vmem:[#allocation3 + $0x1] sm:$0x1]
        %v549 = vld [vmem:[%s516] sm:$0xf]
        %v550 = vld [vmem:[%s516 + $0x4] sm:$0xf]
        %v551 = vld [vmem:[%s516 + $0x8] sm:$0xf]
        %v552 = vld [vmem:[%s516 + $0xc] sm:$0xf]
        %v553 = vld [vmem:[%s440] sm:$0x1]
        %v554 = vld [vmem:[%s521] sm:$0xf]
        %v555 = vld [vmem:[%s521 + $0x4] sm:$0xf]
        %v556 = vld [vmem:[%s521 + $0x8] sm:$0xf]
        %v557 = vld [vmem:[%s521 + $0xc] sm:$0xf]
        %v558 = vld [vmem:[%s526] sm:$0xf]
        %v559 = vld [vmem:[%s526 + $0x4] sm:$0xf]
        %v560 = vld [vmem:[%s526 + $0x8] sm:$0xf]
        %v561 = vld [vmem:[%s526 + $0xc] sm:$0xf]
        %v562 = vld [vmem:[%s529] sm:$0x1]
        %v563 = vld [vmem:[%s534] sm:$0xf]
        %v564 = vld [vmem:[%s534 + $0x4] sm:$0xf]
        %v565 = vld [vmem:[%s534 + $0x8] sm:$0xf]
        %v566 = vld [vmem:[%s534 + $0xc] sm:$0xf]
        %v567 = vld [vmem:[%s534 + $0x10] sm:$0xf]
        %v568 = vld [vmem:[%s534 + $0x14] sm:$0xf]
        %v569 = vld [vmem:[%s534 + $0x18] sm:$0xf]
        %v570 = vld [vmem:[%s534 + $0x1c] sm:$0xf]
        %v571 = vld [vmem:[%s450] sm:$0xff]
        %v572 = vpack.c.bf16 %v546, %v545
        %v574 = vperm.slane %v553, 0
        %v580 = vunpack.c.l.b16 %v549
        %v581 = vunpack.c.l.b16 %v550
        %v582 = vunpack.c.l.b16 %v551
        %v583 = vunpack.c.l.b16 %v552
        %v584 = vpack.c.b16 %v581, %v580
        %v585 = vpack.c.b16 %v583, %v582
        %vm588 = vcmask 261120
        %v590 = vsel %vm588, %v572, 0
        %592 = vmatpush.bf16.msra.mxu0 0
        %593 = vmatpush.bf16.msra.mxu0 0
        %594 = vmatpush.bf16.msra.mxu0 0
        %595 = vmatpush.bf16.msra.mxu0 0
        %596 = vmatpush.bf16.msra.mxu0 0
        %597 = vmatpush.bf16.msra.mxu0 0
        %598 = vmatpush.bf16.msra.mxu0 %v585
        %599 = vmatpush.bf16.msra.mxu0 %v584
        %600 = vmatmul.bf16.gmra.mxu0 %v590
        %v601 = vpop.f32.mrf.mxu0
        %v602 = vadd.f32 %v574, %v601
        %v603 = vpop.f32.mrf.mxu0
        %v604 = vadd.f32 %v574, %v603
        %605 = vdwg.mxu0
        %v606 = vmul.f32 %v602, 0.35355338
        %v607 = vmul.f32 %v604, 0.35355338
        %v608 = vpack.c.bf16 %v606, %v606
        %v609 = vpack.c.bf16 %v607, %v607
        %v610 = vpack.c.bf16 %v602, %v602
        %v611 = vpack.c.bf16 %v604, %v604
        %v614 = vperm.slane %v547, 0
        %v615 = vperm.slane %v548, 0
        %v619 = vunpack.c.l.b16 %v610
        %v620 = vpack.c.b16 %v619, %v619
        %621 = vrot.lane.b32.xlu0 %v620, 96
        %v622 = vpop.permute.xlu0 %621
        %vm623 = vcmask 64512
        %v625 = vsel %vm623, %v608, 0
        %v628 = vsel %vm623, %v622, 0
        %630 = vmatpush.bf16.xpose.msra.mxu0 0
        %631 = vmatpush.bf16.xpose.msra.mxu0 0
        %632 = vmatpush.bf16.xpose.msra.mxu0 0
        %633 = vmatpush.bf16.xpose.msra.mxu0 0
        %634 = vmatpush.bf16.xpose.msra.mxu0 0
        %635 = vmatpush.bf16.xpose.msra.mxu0 0
        %636 = vmatpush.bf16.xpose.msra.mxu0 0
        %637 = vmatpush.bf16.xpose.msra.mxu0 %v628
        %638 = vmatmul.bf16.gmra.mxu0 %v625
        %v639 = vpop.f32.mrf.mxu0
        %v640 = vadd.f32 %v614, %v639
        %v641 = vpop.f32.mrf.mxu0
        %642 = vdwg.mxu0
        %v644 = vunpack.c.l.b16 %v611
        %v645 = vpack.c.b16 %v644, %v644
        %646 = vrot.lane.b32.xlu0 %v645, 96
        %v647 = vpop.permute.xlu0 %646
        %v649 = vsel %vm623, %v609, 0
        %v652 = vsel %vm623, %v647, 0
        %654 = vmatpush.bf16.xpose.msra.mxu0 0
        %655 = vmatpush.bf16.xpose.msra.mxu0 0
        %656 = vmatpush.bf16.xpose.msra.mxu0 0
        %657 = vmatpush.bf16.xpose.msra.mxu0 0
        %658 = vmatpush.bf16.xpose.msra.mxu0 0
        %659 = vmatpush.bf16.xpose.msra.mxu0 0
        %660 = vmatpush.bf16.xpose.msra.mxu0 0
        %661 = vmatpush.bf16.xpose.msra.mxu0 %v652
        %662 = vmatmul.bf16.gmra.mxu0 %v649
        %v663 = vpop.f32.mrf.mxu0
        %v664 = vadd.f32 %v615, %v663
        %v665 = vpop.f32.mrf.mxu0
        %666 = vdwg.mxu0
        %v667 = vsel %vm623, %v640, -inf
        %668 = vmax.xlane.f32.xlu0 %v667
        %v669 = vpop.xlane.xlu0 %668
        %v670 = vsel %vm623, %v664, -inf
        %671 = vmax.xlane.f32.xlu0 %v670
        %v672 = vpop.xlane.xlu0 %671
        %v673 = vsub.f32 %v640, %v669
        %v674 = vsub.f32 %v664, %v672
        %v675 = vmul.f32 %v673, 1.442695
        %v676 = vpow.pop %v675
        %v677 = vmul.f32 %v674, 1.442695
        %v678 = vpow.pop %v677
        %v679 = vsel %vm623, %v676, 0.0
        %680 = vadd.xlane.f32.xlu0 %v679
        %v681 = vpop.xlane.xlu0 %680
        %v682 = vsel %vm623, %v678, 0.0
        %683 = vadd.xlane.f32.xlu0 %v682
        %v684 = vpop.xlane.xlu0 %683
        %v685 = vpack.c.bf16 %v676, %v676
        %v686 = vpack.c.bf16 %v678, %v678
        %687 = vrot.lane.b32.xlu0 %v620, 64
        %v688 = vpop.permute.xlu0 %687
        %v690 = vsel %vm623, %v685, 0
        %vm692 = vcmask 1043456
        %v694 = vsel %vm692, %v688, 0
        %696 = vmatpush.bf16.msra.mxu0 0
        %697 = vmatpush.bf16.msra.mxu0 0
        %698 = vmatpush.bf16.msra.mxu0 0
        %699 = vmatpush.bf16.msra.mxu0 0
        %700 = vmatpush.bf16.msra.mxu0 0
        %701 = vmatpush.bf16.msra.mxu0 0
        %702 = vmatpush.bf16.msra.mxu0 0
        %703 = vmatpush.bf16.msra.mxu0 %v694
        %704 = vmatmul.bf16.gmra.mxu0 %v690
        %v705 = vpop.f32.mrf.mxu0
        %v706 = vadd.f32 0.0, %v705
        %v707 = vpop.f32.mrf.mxu0
        %708 = vdwg.mxu0
        %709 = vrot.lane.b32.xlu0 %v645, 64
        %v710 = vpop.permute.xlu0 %709
        %v712 = vsel %vm623, %v686, 0
        %v715 = vsel %vm692, %v710, 0
        %717 = vmatpush.bf16.msra.mxu0 0
        %718 = vmatpush.bf16.msra.mxu0 0
        %719 = vmatpush.bf16.msra.mxu0 0
        %720 = vmatpush.bf16.msra.mxu0 0
        %721 = vmatpush.bf16.msra.mxu0 0
        %722 = vmatpush.bf16.msra.mxu0 0
        %723 = vmatpush.bf16.msra.mxu0 0
        %724 = vmatpush.bf16.msra.mxu0 %v715
        %725 = vmatmul.bf16.gmra.mxu0 %v712
        %v726 = vpop.f32.mrf.mxu0
        %v727 = vadd.f32 0.0, %v726
        %v728 = vpop.f32.mrf.mxu0
        %729 = vdwg.mxu0
        %v730 = vrcp.pop %v681
        %v731 = vrcp.pop %v684
        %v732 = vmul.f32 %v706, %v730
        %v733 = vmul.f32 %v727, %v731
        %v734 = vpack.c.bf16 %v733, %v732
        %v736 = vunpack.c.l.b16 %v608
        %v737 = vpack.c.b16 %v736, %v736
        %738 = vrot.lane.b32.xlu0 %v737, 120
        %v739 = vpop.permute.xlu0 %738
        %740 = vrot.lane.b32.xlu0 %v620, 88
        %v741 = vpop.permute.xlu0 %740
        %v743 = vsel %vm623, %v739, 0
        %v746 = vsel %vm623, %v741, 0
        %748 = vmatpush.bf16.xpose.msra.mxu0 0
        %749 = vmatpush.bf16.xpose.msra.mxu0 0
        %750 = vmatpush.bf16.xpose.msra.mxu0 0
        %751 = vmatpush.bf16.xpose.msra.mxu0 0
        %752 = vmatpush.bf16.xpose.msra.mxu0 0
        %753 = vmatpush.bf16.xpose.msra.mxu0 0
        %754 = vmatpush.bf16.xpose.msra.mxu0 0
        %755 = vmatpush.bf16.xpose.msra.mxu0 %v746
        %756 = vmatmul.bf16.gmra.mxu0 %v743
        %v757 = vpop.f32.mrf.mxu0
        %v758 = vadd.f32 %v614, %v757
        %v759 = vpop.f32.mrf.mxu0
        %760 = vdwg.mxu0
        %v762 = vunpack.c.l.b16 %v609
        %v763 = vpack.c.b16 %v762, %v762
        %764 = vrot.lane.b32.xlu0 %v763, 120
        %v765 = vpop.permute.xlu0 %764
        %766 = vrot.lane.b32.xlu0 %v645, 88
        %v767 = vpop.permute.xlu0 %766
        %v769 = vsel %vm623, %v765, 0
        %v772 = vsel %vm623, %v767, 0
        %774 = vmatpush.bf16.xpose.msra.mxu0 0
        %775 = vmatpush.bf16.xpose.msra.mxu0 0
        %776 = vmatpush.bf16.xpose.msra.mxu0 0
        %777 = vmatpush.bf16.xpose.msra.mxu0 0
        %778 = vmatpush.bf16.xpose.msra.mxu0 0
        %779 = vmatpush.bf16.xpose.msra.mxu0 0
        %780 = vmatpush.bf16.xpose.msra.mxu0 0
        %781 = vmatpush.bf16.xpose.msra.mxu0 %v772
        %782 = vmatmul.bf16.gmra.mxu0 %v769
        %v783 = vpop.f32.mrf.mxu0
        %v784 = vadd.f32 %v615, %v783
        %v785 = vpop.f32.mrf.mxu0
        %786 = vdwg.mxu0
        %v787 = vsel %vm623, %v758, -inf
        %788 = vmax.xlane.f32.xlu0 %v787
        %v789 = vpop.xlane.xlu0 %788
        %v790 = vsel %vm623, %v784, -inf
        %791 = vmax.xlane.f32.xlu0 %v790
        %v792 = vpop.xlane.xlu0 %791
        %v793 = vsub.f32 %v758, %v789
        %v794 = vsub.f32 %v784, %v792
        %v795 = vmul.f32 %v793, 1.442695
        %v796 = vpow.pop %v795
        %v797 = vmul.f32 %v794, 1.442695
        %v798 = vpow.pop %v797
        %v799 = vsel %vm623, %v796, 0.0
        %800 = vadd.xlane.f32.xlu0 %v799
        %v801 = vpop.xlane.xlu0 %800
        %v802 = vsel %vm623, %v798, 0.0
        %803 = vadd.xlane.f32.xlu0 %v802
        %v804 = vpop.xlane.xlu0 %803
        %v805 = vpack.c.bf16 %v796, %v796
        %v806 = vpack.c.bf16 %v798, %v798
        %807 = vrot.lane.b32.xlu0 %v620, 56
        %v808 = vpop.permute.xlu0 %807
        %v810 = vsel %vm623, %v805, 0
        %v813 = vsel %vm692, %v808, 0
        %815 = vmatpush.bf16.msra.mxu0 0
        %816 = vmatpush.bf16.msra.mxu0 0
        %817 = vmatpush.bf16.msra.mxu0 0
        %818 = vmatpush.bf16.msra.mxu0 0
        %819 = vmatpush.bf16.msra.mxu0 0
        %820 = vmatpush.bf16.msra.mxu0 0
        %821 = vmatpush.bf16.msra.mxu0 0
        %822 = vmatpush.bf16.msra.mxu0 %v813
        %823 = vmatmul.bf16.gmra.mxu0 %v810
        %v824 = vpop.f32.mrf.mxu0
        %v825 = vadd.f32 0.0, %v824
        %v826 = vpop.f32.mrf.mxu0
        %827 = vdwg.mxu0
        %828 = vrot.lane.b32.xlu0 %v645, 56
        %v829 = vpop.permute.xlu0 %828
        %v831 = vsel %vm623, %v806, 0
        %v834 = vsel %vm692, %v829, 0
        %836 = vmatpush.bf16.msra.mxu0 0
        %837 = vmatpush.bf16.msra.mxu0 0
        %838 = vmatpush.bf16.msra.mxu0 0
        %839 = vmatpush.bf16.msra.mxu0 0
        %840 = vmatpush.bf16.msra.mxu0 0
        %841 = vmatpush.bf16.msra.mxu0 0
        %842 = vmatpush.bf16.msra.mxu0 0
        %843 = vmatpush.bf16.msra.mxu0 %v834
        %844 = vmatmul.bf16.gmra.mxu0 %v831
        %v845 = vpop.f32.mrf.mxu0
        %v846 = vadd.f32 0.0, %v845
        %v847 = vpop.f32.mrf.mxu0
        %848 = vdwg.mxu0
        %v849 = vrcp.pop %v801
        %v850 = vrcp.pop %v804
        %v851 = vmul.f32 %v825, %v849
        %v852 = vmul.f32 %v846, %v850
        %v853 = vpack.c.bf16 %v852, %v851
        %v855 = vsel %vm623, %v853, 0
        %v858 = vsel %vm692, %v555, 0
        %860 = vmatpush.bf16.msra.mxu0 0
        %861 = vmatpush.bf16.msra.mxu0 0
        %862 = vmatpush.bf16.msra.mxu0 0
        %863 = vmatpush.bf16.msra.mxu0 0
        %864 = vmatpush.bf16.msra.mxu0 0
        %865 = vmatpush.bf16.msra.mxu0 0
        %866 = vmatpush.bf16.msra.mxu0 0
        %867 = vmatpush.bf16.msra.mxu0 %v858
        %868 = vmatmul.bf16.gmra.mxu0 %v855
        %v869 = vpop.f32.mrf.mxu0
        %v870 = vadd.f32 0.0, %v869
        %v871 = vpop.f32.mrf.mxu0
        %v872 = vadd.f32 0.0, %v871
        %873 = vdwg.mxu0
        %v875 = vsel %vm623, %v734, 0
        %v878 = vsel %vm692, %v554, 0
        %880 = vmatpush.bf16.msra.mxu0 0
        %881 = vmatpush.bf16.msra.mxu0 0
        %882 = vmatpush.bf16.msra.mxu0 0
        %883 = vmatpush.bf16.msra.mxu0 0
        %884 = vmatpush.bf16.msra.mxu0 0
        %885 = vmatpush.bf16.msra.mxu0 0
        %886 = vmatpush.bf16.msra.mxu0 0
        %887 = vmatpush.bf16.msra.mxu0 %v878
        %888 = vmatmul.bf16.gmra.mxu0 %v875
        %v889 = vpop.f32.mrf.mxu0
        %v890 = vadd.f32 %v870, %v889
        %v891 = vpop.f32.mrf.mxu0
        %v892 = vadd.f32 %v872, %v891
        %893 = vdwg.mxu0
        %894 = vrot.lane.b32.xlu0 %v737, 112
        %v895 = vpop.permute.xlu0 %894
        %896 = vrot.lane.b32.xlu0 %v620, 80
        %v897 = vpop.permute.xlu0 %896
        %v899 = vsel %vm623, %v895, 0
        %v902 = vsel %vm623, %v897, 0
        %904 = vmatpush.bf16.xpose.msra.mxu0 0
        %905 = vmatpush.bf16.xpose.msra.mxu0 0
        %906 = vmatpush.bf16.xpose.msra.mxu0 0
        %907 = vmatpush.bf16.xpose.msra.mxu0 0
        %908 = vmatpush.bf16.xpose.msra.mxu0 0
        %909 = vmatpush.bf16.xpose.msra.mxu0 0
        %910 = vmatpush.bf16.xpose.msra.mxu0 0
        %911 = vmatpush.bf16.xpose.msra.mxu0 %v902
        %912 = vmatmul.bf16.gmra.mxu0 %v899
        %v913 = vpop.f32.mrf.mxu0
        %v914 = vadd.f32 %v614, %v913
        %v915 = vpop.f32.mrf.mxu0
        %916 = vdwg.mxu0
        %917 = vrot.lane.b32.xlu0 %v763, 112
        %v918 = vpop.permute.xlu0 %917
        %919 = vrot.lane.b32.xlu0 %v645, 80
        %v920 = vpop.permute.xlu0 %919
        %v922 = vsel %vm623, %v918, 0
        %v925 = vsel %vm623, %v920, 0
        %927 = vmatpush.bf16.xpose.msra.mxu0 0
        %928 = vmatpush.bf16.xpose.msra.mxu0 0
        %929 = vmatpush.bf16.xpose.msra.mxu0 0
        %930 = vmatpush.bf16.xpose.msra.mxu0 0
        %931 = vmatpush.bf16.xpose.msra.mxu0 0
        %932 = vmatpush.bf16.xpose.msra.mxu0 0
        %933 = vmatpush.bf16.xpose.msra.mxu0 0
        %934 = vmatpush.bf16.xpose.msra.mxu0 %v925
        %935 = vmatmul.bf16.gmra.mxu0 %v922
        %v936 = vpop.f32.mrf.mxu0
        %v937 = vadd.f32 %v615, %v936
        %v938 = vpop.f32.mrf.mxu0
        %939 = vdwg.mxu0
        %v940 = vsel %vm623, %v914, -inf
        %941 = vmax.xlane.f32.xlu0 %v940
        %v942 = vpop.xlane.xlu0 %941
        %v943 = vsel %vm623, %v937, -inf
        %944 = vmax.xlane.f32.xlu0 %v943
        %v945 = vpop.xlane.xlu0 %944
        %v946 = vsub.f32 %v914, %v942
        %v947 = vsub.f32 %v937, %v945
        %v948 = vmul.f32 %v946, 1.442695
        %v949 = vpow.pop %v948
        %v950 = vmul.f32 %v947, 1.442695
        %v951 = vpow.pop %v950
        %v952 = vsel %vm623, %v949, 0.0
        %953 = vadd.xlane.f32.xlu0 %v952
        %v954 = vpop.xlane.xlu0 %953
        %v955 = vsel %vm623, %v951, 0.0
        %956 = vadd.xlane.f32.xlu0 %v955
        %v957 = vpop.xlane.xlu0 %956
        %v958 = vpack.c.bf16 %v949, %v949
        %v959 = vpack.c.bf16 %v951, %v951
        %960 = vrot.lane.b32.xlu0 %v620, 48
        %v961 = vpop.permute.xlu0 %960
        %v963 = vsel %vm623, %v958, 0
        %v966 = vsel %vm692, %v961, 0
        %968 = vmatpush.bf16.msra.mxu0 0
        %969 = vmatpush.bf16.msra.mxu0 0
        %970 = vmatpush.bf16.msra.mxu0 0
        %971 = vmatpush.bf16.msra.mxu0 0
        %972 = vmatpush.bf16.msra.mxu0 0
        %973 = vmatpush.bf16.msra.mxu0 0
        %974 = vmatpush.bf16.msra.mxu0 0
        %975 = vmatpush.bf16.msra.mxu0 %v966
        %976 = vmatmul.bf16.gmra.mxu0 %v963
        %v977 = vpop.f32.mrf.mxu0
        %v978 = vadd.f32 0.0, %v977
        %v979 = vpop.f32.mrf.mxu0
        %980 = vdwg.mxu0
        %981 = vrot.lane.b32.xlu0 %v645, 48
        %v982 = vpop.permute.xlu0 %981
        %v984 = vsel %vm623, %v959, 0
        %v987 = vsel %vm692, %v982, 0
        %989 = vmatpush.bf16.msra.mxu0 0
        %990 = vmatpush.bf16.msra.mxu0 0
        %991 = vmatpush.bf16.msra.mxu0 0
        %992 = vmatpush.bf16.msra.mxu0 0
        %993 = vmatpush.bf16.msra.mxu0 0
        %994 = vmatpush.bf16.msra.mxu0 0
        %995 = vmatpush.bf16.msra.mxu0 0
        %996 = vmatpush.bf16.msra.mxu0 %v987
        %997 = vmatmul.bf16.gmra.mxu0 %v984
        %v998 = vpop.f32.mrf.mxu0
        %v999 = vadd.f32 0.0, %v998
        %v1000 = vpop.f32.mrf.mxu0
        %1001 = vdwg.mxu0
        %v1002 = vrcp.pop %v954
        %v1003 = vrcp.pop %v957
        %v1004 = vmul.f32 %v978, %v1002
        %v1005 = vmul.f32 %v999, %v1003
        %v1006 = vpack.c.bf16 %v1005, %v1004
        %v1008 = vsel %vm623, %v1006, 0
        %v1011 = vsel %vm692, %v556, 0
        %1013 = vmatpush.bf16.msra.mxu0 0
        %1014 = vmatpush.bf16.msra.mxu0 0
        %1015 = vmatpush.bf16.msra.mxu0 0
        %1016 = vmatpush.bf16.msra.mxu0 0
        %1017 = vmatpush.bf16.msra.mxu0 0
        %1018 = vmatpush.bf16.msra.mxu0 0
        %1019 = vmatpush.bf16.msra.mxu0 0
        %1020 = vmatpush.bf16.msra.mxu0 %v1011
        %1021 = vmatmul.bf16.gmra.mxu0 %v1008
        %v1022 = vpop.f32.mrf.mxu0
        %v1023 = vadd.f32 0.0, %v1022
        %v1024 = vpop.f32.mrf.mxu0
        %v1025 = vadd.f32 0.0, %v1024
        %1026 = vdwg.mxu0
        %v1027 = vadd.f32 %v890, %v1023
        %v1028 = vadd.f32 %v892, %v1025
        %1029 = vrot.lane.b32.xlu0 %v737, 104
        %v1030 = vpop.permute.xlu0 %1029
        %1031 = vrot.lane.b32.xlu0 %v620, 72
        %v1032 = vpop.permute.xlu0 %1031
        %v1034 = vsel %vm623, %v1030, 0
        %v1037 = vsel %vm623, %v1032, 0
        %1039 = vmatpush.bf16.xpose.msra.mxu0 0
        %1040 = vmatpush.bf16.xpose.msra.mxu0 0
        %1041 = vmatpush.bf16.xpose.msra.mxu0 0
        %1042 = vmatpush.bf16.xpose.msra.mxu0 0
        %1043 = vmatpush.bf16.xpose.msra.mxu0 0
        %1044 = vmatpush.bf16.xpose.msra.mxu0 0
        %1045 = vmatpush.bf16.xpose.msra.mxu0 0
        %1046 = vmatpush.bf16.xpose.msra.mxu0 %v1037
        %1047 = vmatmul.bf16.gmra.mxu0 %v1034
        %v1048 = vpop.f32.mrf.mxu0
        %v1049 = vadd.f32 %v614, %v1048
        %v1050 = vpop.f32.mrf.mxu0
        %1051 = vdwg.mxu0
        %1052 = vrot.lane.b32.xlu0 %v763, 104
        %v1053 = vpop.permute.xlu0 %1052
        %1054 = vrot.lane.b32.xlu0 %v645, 72
        %v1055 = vpop.permute.xlu0 %1054
        %v1057 = vsel %vm623, %v1053, 0
        %v1060 = vsel %vm623, %v1055, 0
        %1062 = vmatpush.bf16.xpose.msra.mxu0 0
        %1063 = vmatpush.bf16.xpose.msra.mxu0 0
        %1064 = vmatpush.bf16.xpose.msra.mxu0 0
        %1065 = vmatpush.bf16.xpose.msra.mxu0 0
        %1066 = vmatpush.bf16.xpose.msra.mxu0 0
        %1067 = vmatpush.bf16.xpose.msra.mxu0 0
        %1068 = vmatpush.bf16.xpose.msra.mxu0 0
        %1069 = vmatpush.bf16.xpose.msra.mxu0 %v1060
        %1070 = vmatmul.bf16.gmra.mxu0 %v1057
        %v1071 = vpop.f32.mrf.mxu0
        %v1072 = vadd.f32 %v615, %v1071
        %v1073 = vpop.f32.mrf.mxu0
        %1074 = vdwg.mxu0
        %v1075 = vsel %vm623, %v1049, -inf
        %1076 = vmax.xlane.f32.xlu0 %v1075
        %v1077 = vpop.xlane.xlu0 %1076
        %v1078 = vsel %vm623, %v1072, -inf
        %1079 = vmax.xlane.f32.xlu0 %v1078
        %v1080 = vpop.xlane.xlu0 %1079
        %v1081 = vsub.f32 %v1049, %v1077
        %v1082 = vsub.f32 %v1072, %v1080
        %v1083 = vmul.f32 %v1081, 1.442695
        %v1084 = vpow.pop %v1083
        %v1085 = vmul.f32 %v1082, 1.442695
        %v1086 = vpow.pop %v1085
        %v1087 = vsel %vm623, %v1084, 0.0
        %1088 = vadd.xlane.f32.xlu0 %v1087
        %v1089 = vpop.xlane.xlu0 %1088
        %v1090 = vsel %vm623, %v1086, 0.0
        %1091 = vadd.xlane.f32.xlu0 %v1090
        %v1092 = vpop.xlane.xlu0 %1091
        %v1093 = vpack.c.bf16 %v1084, %v1084
        %v1094 = vpack.c.bf16 %v1086, %v1086
        %1095 = vrot.lane.b32.xlu0 %v620, 40
        %v1096 = vpop.permute.xlu0 %1095
        %v1098 = vsel %vm623, %v1093, 0
        %v1101 = vsel %vm692, %v1096, 0
        %1103 = vmatpush.bf16.msra.mxu0 0
        %1104 = vmatpush.bf16.msra.mxu0 0
        %1105 = vmatpush.bf16.msra.mxu0 0
        %1106 = vmatpush.bf16.msra.mxu0 0
        %1107 = vmatpush.bf16.msra.mxu0 0
        %1108 = vmatpush.bf16.msra.mxu0 0
        %1109 = vmatpush.bf16.msra.mxu0 0
        %1110 = vmatpush.bf16.msra.mxu0 %v1101
        %1111 = vmatmul.bf16.gmra.mxu0 %v1098
        %v1112 = vpop.f32.mrf.mxu0
        %v1113 = vadd.f32 0.0, %v1112
        %v1114 = vpop.f32.mrf.mxu0
        %1115 = vdwg.mxu0
        %1116 = vrot.lane.b32.xlu0 %v645, 40
        %v1117 = vpop.permute.xlu0 %1116
        %v1119 = vsel %vm623, %v1094, 0
        %v1122 = vsel %vm692, %v1117, 0
        %1124 = vmatpush.bf16.msra.mxu0 0
        %1125 = vmatpush.bf16.msra.mxu0 0
        %1126 = vmatpush.bf16.msra.mxu0 0
        %1127 = vmatpush.bf16.msra.mxu0 0
        %1128 = vmatpush.bf16.msra.mxu0 0
        %1129 = vmatpush.bf16.msra.mxu0 0
        %1130 = vmatpush.bf16.msra.mxu0 0
        %1131 = vmatpush.bf16.msra.mxu0 %v1122
        %1132 = vmatmul.bf16.gmra.mxu0 %v1119
        %v1133 = vpop.f32.mrf.mxu0
        %v1134 = vadd.f32 0.0, %v1133
        %v1135 = vpop.f32.mrf.mxu0
        %1136 = vdwg.mxu0
        %v1137 = vrcp.pop %v1089
        %v1138 = vrcp.pop %v1092
        %v1139 = vmul.f32 %v1113, %v1137
        %v1140 = vmul.f32 %v1134, %v1138
        %v1141 = vpack.c.bf16 %v1140, %v1139
        %v1143 = vsel %vm623, %v1141, 0
        %v1146 = vsel %vm692, %v557, 0
        %1148 = vmatpush.bf16.msra.mxu0 0
        %1149 = vmatpush.bf16.msra.mxu0 0
        %1150 = vmatpush.bf16.msra.mxu0 0
        %1151 = vmatpush.bf16.msra.mxu0 0
        %1152 = vmatpush.bf16.msra.mxu0 0
        %1153 = vmatpush.bf16.msra.mxu0 0
        %1154 = vmatpush.bf16.msra.mxu0 0
        %1155 = vmatpush.bf16.msra.mxu0 %v1146
        %1156 = vmatmul.bf16.gmra.mxu0 %v1143
        %v1157 = vpop.f32.mrf.mxu0
        %v1158 = vadd.f32 0.0, %v1157
        %v1159 = vpop.f32.mrf.mxu0
        %v1160 = vadd.f32 0.0, %v1159
        %1161 = vdwg.mxu0
        %v1162 = vadd.f32 %v1027, %v1158
        %v1163 = vadd.f32 %v1028, %v1160
        %v1164 = vperm.slane %v571, 0
        %v1165 = vadd.f32 %v1162, %v1164
        %v1166 = vadd.f32 %v1163, %v1164
        %v1167 = vadd.f32 %v545, %v1165
        %v1168 = vadd.f32 %v546, %v1166
        %v1169 = vsel %vm588, %v1167, 0.0
        %1170 = vadd.xlane.f32.xlu0 %v1169
        %v1171 = vpop.xlane.xlu0 %1170
        %v1172 = vsel %vm588, %v1168, 0.0
        %1173 = vadd.xlane.f32.xlu0 %v1172
        %v1174 = vpop.xlane.xlu0 %1173
        %v1175 = vrcp.pop 32.0
        %v1176 = vmul.f32 32.0, %v1175
        %v1177 = vsub.f32 1.0, %v1176
        %v1178 = vmul.f32 %v1175, %v1177
        %v1179 = vadd.f32 %v1175, %v1178
        %vm1180 = vweird.f32 %v1175
        %v1181 = vsel %vm1180, %v1175, %v1179
        %v1182 = vmul.f32 %v1171, %v1181
        %v1183 = vmul.f32 %v1174, %v1181
        %v1184 = vsub.f32 %v1167, %v1182
        %v1185 = vsub.f32 %v1168, %v1183
        %v1186 = vmul.f32 %v1184, %v1184
        %v1187 = vmul.f32 %v1185, %v1185
        %v1188 = vsel %vm588, %v1186, 0.0
        %1189 = vadd.xlane.f32.xlu0 %v1188
        %v1190 = vpop.xlane.xlu0 %1189
        %v1191 = vsel %vm588, %v1187, 0.0
        %1192 = vadd.xlane.f32.xlu0 %v1191
        %v1193 = vpop.xlane.xlu0 %1192
        %v1194 = vmul.f32 %v1190, %v1181
        %v1195 = vmul.f32 %v1193, %v1181
        %v1196 = vadd.f32 %v1194, 1e-05
        %v1197 = vadd.f32 %v1195, 1e-05
        %v1198 = vrsqrt.pop %v1196
        %v1199 = vmul.f32 %v1198, %v1196
        %v1200 = vmul.f32 %v1199, %v1198
        %v1201 = vmul.f32 0.5, %v1200
        %v1202 = vsub.f32 1.5, %v1201
        %v1203 = vmul.f32 %v1198, %v1202
        %vm1204 = vweird.f32 %v1196
        %vm1205 = vweird.f32 %v1198
        %vm1206 = vmor %vm1204, %vm1205
        %v1207 = vsel %vm1206, %v1198, %v1203
        %v1208 = vrsqrt.pop %v1197
        %v1209 = vmul.f32 %v1208, %v1197
        %v1210 = vmul.f32 %v1209, %v1208
        %v1211 = vmul.f32 0.5, %v1210
        %v1212 = vsub.f32 1.5, %v1211
        %v1213 = vmul.f32 %v1208, %v1212
        %vm1214 = vweird.f32 %v1197
        %vm1215 = vweird.f32 %v1208
        %vm1216 = vmor %vm1214, %vm1215
        %v1217 = vsel %vm1216, %v1208, %v1213
        %v1218 = vmul.f32 %v1184, %v1207
        %v1219 = vmul.f32 %v1185, %v1217
        %v1220 = vperm.slane %v571, 2
        %v1221 = vmul.f32 %v1218, %v1220
        %v1222 = vmul.f32 %v1219, %v1220
        %v1223 = vperm.slane %v571, 3
        %v1224 = vadd.f32 %v1221, %v1223
        %v1225 = vadd.f32 %v1222, %v1223
        %v1226 = vpack.c.bf16 %v1225, %v1224
        %v1228 = vperm.slane %v562, 0
        %v1234 = vunpack.c.l.b16 %v558
        %v1235 = vunpack.c.l.b16 %v559
        %v1236 = vunpack.c.l.b16 %v560
        %v1237 = vunpack.c.l.b16 %v561
        %v1238 = vpack.c.b16 %v1235, %v1234
        %v1239 = vpack.c.b16 %v1237, %v1236
        %v1243 = vsel %vm588, %v1226, 0
        %1245 = vmatpush.bf16.msra.mxu0 0
        %1246 = vmatpush.bf16.msra.mxu0 0
        %1247 = vmatpush.bf16.msra.mxu0 0
        %1248 = vmatpush.bf16.msra.mxu0 0
        %1249 = vmatpush.bf16.msra.mxu0 0
        %1250 = vmatpush.bf16.msra.mxu0 0
        %1251 = vmatpush.bf16.msra.mxu0 %v1239
        %1252 = vmatpush.bf16.msra.mxu0 %v1238
        %1253 = vmatmul.bf16.gmra.mxu0 %v1243
        %v1254 = vpop.f32.mrf.mxu0
        %v1255 = vadd.f32 %v1228, %v1254
        %v1256 = vpop.f32.mrf.mxu0
        %v1257 = vadd.f32 %v1228, %v1256
        %1258 = vdwg.mxu0
        %v1259 = vmax.f32 %v1255, 0.0
        %v1260 = vmax.f32 %v1257, 0.0
        %v1261 = vpack.c.bf16 %v1260, %v1259
        %v1262 = vperm.slane %v571, 1
        %v1271 = vunpack.c.l.b16 %v563
        %v1272 = vunpack.c.l.b16 %v564
        %v1273 = vunpack.c.l.b16 %v565
        %v1274 = vunpack.c.l.b16 %v566
        %v1275 = vunpack.c.l.b16 %v567
        %v1276 = vunpack.c.l.b16 %v568
        %v1277 = vunpack.c.l.b16 %v569
        %v1278 = vunpack.c.l.b16 %v570
        %v1279 = vpack.c.b16 %v1272, %v1271
        %v1280 = vpack.c.b16 %v1274, %v1273
        %v1281 = vpack.c.b16 %v1276, %v1275
        %v1282 = vpack.c.b16 %v1278, %v1277
        %vm1287 = vcmask 523264
        %v1289 = vsel %vm1287, %v1261, 0
        %1291 = vmatpush.bf16.msra.mxu0 0
        %1292 = vmatpush.bf16.msra.mxu0 0
        %1293 = vmatpush.bf16.msra.mxu0 0
        %1294 = vmatpush.bf16.msra.mxu0 0
        %1295 = vmatpush.bf16.msra.mxu0 %v1282
        %1296 = vmatpush.bf16.msra.mxu0 %v1281
        %1297 = vmatpush.bf16.msra.mxu0 %v1280
        %1298 = vmatpush.bf16.msra.mxu0 %v1279
        %1299 = vmatmul.bf16.gmra.mxu0 %v1289
        %v1300 = vpop.f32.mrf.mxu0
        %v1301 = vadd.f32 %v1262, %v1300
        %v1302 = vpop.f32.mrf.mxu0
        %v1303 = vadd.f32 %v1262, %v1302
        %1304 = vdwg.mxu0
        %v1305 = vadd.f32 %v1224, %v1301
        %v1306 = vadd.f32 %v1225, %v1303
        %v1307 = vsel %vm588, %v1305, 0.0
        %1308 = vadd.xlane.f32.xlu0 %v1307
        %v1309 = vpop.xlane.xlu0 %1308
        %v1310 = vsel %vm588, %v1306, 0.0
        %1311 = vadd.xlane.f32.xlu0 %v1310
        %v1312 = vpop.xlane.xlu0 %1311
        %v1313 = vmul.f32 %v1309, %v1181
        %v1314 = vmul.f32 %v1312, %v1181
        %v1315 = vsub.f32 %v1305, %v1313
        %v1316 = vsub.f32 %v1306, %v1314
        %v1317 = vmul.f32 %v1315, %v1315
        %v1318 = vmul.f32 %v1316, %v1316
        %v1319 = vsel %vm588, %v1317, 0.0
        %1320 = vadd.xlane.f32.xlu0 %v1319
        %v1321 = vpop.xlane.xlu0 %1320
        %v1322 = vsel %vm588, %v1318, 0.0
        %1323 = vadd.xlane.f32.xlu0 %v1322
        %v1324 = vpop.xlane.xlu0 %1323
        %v1325 = vmul.f32 %v1321, %v1181
        %v1326 = vmul.f32 %v1324, %v1181
        %v1327 = vadd.f32 %v1325, 1e-05
        %v1328 = vadd.f32 %v1326, 1e-05
        %v1329 = vrsqrt.pop %v1327
        %v1330 = vmul.f32 %v1329, %v1327
        %v1331 = vmul.f32 %v1330, %v1329
        %v1332 = vmul.f32 0.5, %v1331
        %v1333 = vsub.f32 1.5, %v1332
        %v1334 = vmul.f32 %v1329, %v1333
        %vm1335 = vweird.f32 %v1327
        %vm1336 = vweird.f32 %v1329
        %vm1337 = vmor %vm1335, %vm1336
        %v1338 = vsel %vm1337, %v1329, %v1334
        %v1339 = vrsqrt.pop %v1328
        %v1340 = vmul.f32 %v1339, %v1328
        %v1341 = vmul.f32 %v1340, %v1339
        %v1342 = vmul.f32 0.5, %v1341
        %v1343 = vsub.f32 1.5, %v1342
        %v1344 = vmul.f32 %v1339, %v1343
        %vm1345 = vweird.f32 %v1328
        %vm1346 = vweird.f32 %v1339
        %vm1347 = vmor %vm1345, %vm1346
        %v1348 = vsel %vm1347, %v1339, %v1344
        %v1349 = vmul.f32 %v1315, %v1338
        %v1350 = vmul.f32 %v1316, %v1348
        %v1351 = vperm.slane %v571, 4
        %v1352 = vmul.f32 %v1349, %v1351
        %v1353 = vmul.f32 %v1350, %v1351
        %v1354 = vperm.slane %v571, 5
        %v1355 = vadd.f32 %v1352, %v1354
        %v1356 = vadd.f32 %v1353, %v1354
        %1357 = vst.msk [vmem:[#allocation2] sm:$0xff] %vm588, %v1355
        %1358 = vst.msk [vmem:[#allocation2 + $0x8] sm:$0xff] %vm588, %v1356
        %p1359 = scmp.eq.s32.totalorder %s27, 1
        // Predicated region
        $region81: #{tpu_custom_call.1} parent=63 // pred_check
          %p1360 = pneg %p1359
        $region82: #{tpu_custom_call.1} parent=63 // pred_check_branch
          %1362 = sbr.rel (%p1360) target = $region84
        $region83: #{tpu_custom_call.1} parent=63 // pred_region
          %v1363 = vpack.c.bf16 %v1355, %v1355
          %v1364 = vpack.c.bf16 %v1356, %v1356
          %v1365 = vld [vmem:[%s9] sm:$0xf]
          %v1366 = vld [vmem:[%s9 + $0x4] sm:$0xf]
          %v1367 = vld [vmem:[%s9 + $0x8] sm:$0xf]
          %v1368 = vld [vmem:[%s9 + $0xc] sm:$0xf]
          %v1369 = vld [vmem:[%s10] sm:$0x1]
          %v1371 = vperm.slane %v1369, 0
          %v1375 = vunpack.c.l.b16 %v1363
          %v1376 = vunpack.c.l.b16 %v1364
          %v1377 = vrot.slane %v1376, 7
          %vm1378 = vcmask 1041409
          %v1379 = vsel %vm1378, %v1377, %v1375
          %v1380 = vpack.c.b16 %v1379, %v1379
          %v1385 = vunpack.c.l.b16 %v1365
          %v1386 = vunpack.c.l.b16 %v1366
          %v1387 = vunpack.c.l.b16 %v1367
          %v1388 = vunpack.c.l.b16 %v1368
          %v1389 = vpack.c.b16 %v1386, %v1385
          %v1390 = vpack.c.b16 %v1388, %v1387
          %v1394 = vsel %vm588, %v1380, 0
          %1396 = vmatpush.bf16.msra.mxu0 0
          %1397 = vmatpush.bf16.msra.mxu0 0
          %1398 = vmatpush.bf16.msra.mxu0 0
          %1399 = vmatpush.bf16.msra.mxu0 0
          %1400 = vmatpush.bf16.msra.mxu0 0
          %1401 = vmatpush.bf16.msra.mxu0 0
          %1402 = vmatpush.bf16.msra.mxu0 %v1390
          %1403 = vmatpush.bf16.msra.mxu0 %v1389
          %1404 = vmatmul.bf16.gmra.mxu0 %v1394
          %v1405 = vpop.f32.mrf.mxu0
          %v1406 = vadd.f32 %v1371, %v1405
          %v1407 = vpop.f32.mrf.mxu0
          %1408 = vdwg.mxu0
          %vm1409 = vcmask 9216
          %1410 = vst.msk [vmem:[#allocation9] sm:$0x3] %vm1409, %v1406
        $region84: #{tpu_custom_call.1} parent=63 // pred_fallthru
          _
        // Predicated region
        $region85: #{tpu_custom_call.1} parent=63 // pred_check
          %p1411 = pneg %p306
        $region86: #{tpu_custom_call.1} parent=63 // pred_check_branch
          %1413 = sbr.rel (%p1411) target = $region88
        $region87: #{tpu_custom_call.1} parent=63 // pred_region
          %1415 = vsyncadd [#allocation5], 0
          %s1417 = sshll.u32 [#allocation9], 4
          %s1418 = int_to_ptr.vmem [resolvable:$true] %s1417
          %s1419 = sshll.u32 %s11, 4
          %s1420 = int_to_ptr.hbm [resolvable:$true] %s1419
          %1422 = dma.vmem_to_hbm [thread:$0]  %s1418, 32, %s1420, [#allocation5]
        $region88: #{tpu_custom_call.1} parent=63 // pred_fallthru
          _
        // Predicated region
        $region89: #{tpu_custom_call.1} parent=63 // pred_check
          %p1423 = pneg %p306
        $region90: #{tpu_custom_call.1} parent=63 // pred_check_branch
          %1425 = sbr.rel (%p1423) target = $region92
        $region91: #{tpu_custom_call.1} parent=63 // pred_region
          %1427 = dma.done [#allocation5], 32
        $region92: #{tpu_custom_call.1} parent=63 // pred_fallthru
          _
      $region64: #{tpu_custom_call.1} parent=5 // pred_fallthru
        _
      %p1428 = scmp.le.s32.totalorder 2, %s22
      // Predicated region
      $region93: #{tpu_custom_call.1} parent=5 // pred_check
        %p1429 = pneg %p1428
      $region94: #{tpu_custom_call.1} parent=5 // pred_check_branch
        %1431 = sbr.rel (%p1429) target = $region96
      $region95: #{tpu_custom_call.1} parent=5 // pred_region
        %s1432 = ssub.s32 %s22, 2
      $region96: #{tpu_custom_call.1} parent=5 // pred_fallthru
        _
    $region6: #{tpu_custom_call.1} parent=1 // loop_footer
      %s26 = sadd.s32 1, %s22
    $region7: #{tpu_custom_call.1} parent=1 // loop_footer_branch
      %21 = sbr.rel target = $region3
    $region8: #{tpu_custom_call.1} parent=1 // loop_exit
      _
    %1433 = vsyncpa [#allocation4], 1
    %s1434 = scalar_lea.sflag [#allocation4], 1
    %1435 = vsyncpa %s1434, 1
    %1436 = vsyncpa [#allocation7], 1
    %s1437 = scalar_lea.sflag [#allocation7], 1
    %1438 = vsyncpa %s1437, 1
    %1439 = vsyncpa [#allocation5], 1
    %s1440 = scalar_lea.sflag [#allocation5], 1
    %1441 = vsyncpa %s1440, 1

</llo_original>
